<compile_context>
chip_gen: v6e
topology: v6e:2x2x1
jax: 0.10.0
libtpu: 0.0.40
codegen_flags: <defaults>
</compile_context>

<pallas_src>
import functools

import jax
import jax.numpy as jnp
import numpy as np
from jax.experimental import pallas as pl
from jax.experimental.pallas import tpu as pltpu

# Small, module-consistent shapes.
N, CIN, COUT, H, W = 2, 4, 8, 16, 16


def attention_kernel(x_ref, masks_ref, w1_ref, w2_ref, w3_ref, bias_ref,
                     out_ref, *, w):
    # x_ref    : (R_in,  HW)        R_in = nb*CIN (nb images stacked on sublanes)
    # masks_ref: (9, HW)            f32 border masks for the 9 taps (padding=1)
    # w1_ref   : (9, R_out, R_in)   per-tap block-diagonal conv1 weights
    # w2_ref   : (9, R_out, R_out)  per-tap block-diagonal conv2 weights
    # w3_ref   : (R_in, R_out)      1x1 conv weights, rows replicated per CIN
    # bias_ref : (max(R_in,R_out), 3)  columns = [b1, b2, b3]
    # out_ref  : (R_in, HW)         NCHW output (flattened spatial), lane-dense
    hw = x_ref.shape[-1]
    r_in = x_ref.shape[0]
    r_out = w1_ref.shape[1]

    x = x_ref[...]                                   # (R_in, HW) f32
    bias = bias_ref[...]                             # (rows, 3)

    def conv3x3(act, w_tap_ref, bias_col):
        rows_out = w_tap_ref.shape[1]
        # Bias folded into the accumulator init (hoisted broadcast).
        acc = jnp.broadcast_to(bias_col, (rows_out, hw))
        for k in range(9):
            dy, dx = k // 3 - 1, k % 3 - 1
            d = dy * w + dx
            if d == 0:
                tap = act                            # center tap: no roll/mask
            else:
                tap = (pltpu.roll(act, (-d) % hw, axis=1)    # XLU rotate
                       * masks_ref[pl.ds(k, 1), :])          # precomputed mask
            acc = acc + jnp.dot(w_tap_ref[k], tap,
                                preferred_element_type=jnp.float32)
        return jnp.maximum(acc, 0.0)

    # conv1 (3x3, pad=1) + ReLU : 9 accumulating MXU matmuls
    h1 = conv3x3(x, w1_ref, bias[:r_out, 0:1])       # (R_out, HW)
    # conv2 (3x3, pad=1) + ReLU : 9 accumulating MXU matmuls
    h2 = conv3x3(h1, w2_ref, bias[:r_out, 1:2])      # (R_out, HW)

    # conv3 (1x1) as an MXU matmul; rows already replicated per input channel,
    # so the sigmoid'd attention map multiplies x without any sublane repeat.
    logits = (jnp.dot(w3_ref[...], h2, preferred_element_type=jnp.float32)
              + bias[:r_in, 2:3])                    # (R_in, HW)
    a = jax.nn.sigmoid(logits)                       # EUP
    out_ref[...] = (x * a).astype(out_ref.dtype)     # dense lane store


def _images_per_step(n):
    kind = ""
    try:
        kind = jax.devices()[0].device_kind.lower()
    except Exception:
        pass
    # v7x: 2 TensorCores/chip -> keep one image per (parallel) grid step so
    # both cores are fed.  Single-TC v5e/v6e: collapse the whole batch into
    # one step to avoid per-step overhead and get full-sublane-tile stores.
    if "v7" in kind and n > 1:
        return 1
    return n


def _block_diag(wm, nb):
    # wm: (9, CO, CI) per-tap weights -> (9, nb*CO, nb*CI) block-diagonal.
    k9, co, ci = wm.shape
    eye = jnp.eye(nb, dtype=wm.dtype)
    return jnp.einsum('koc,bd->kbodc', wm, eye).reshape(k9, nb * co, nb * ci)


def _build_masks(h, w):
    hw = h * w
    pos = np.arange(hw)
    row, col = pos // w, pos % w
    m = np.stack([((row + dy >= 0) & (row + dy < h) &
                   (col + dx >= 0) & (col + dx < w)).astype(np.float32)
                  for dy in (-1, 0, 1) for dx in (-1, 0, 1)])
    return jnp.asarray(m)                            # (9, HW)


def attention_forward(x_nchw, params):
    """x_nchw: (N, CIN, H, W) float32 -> (N, CIN, H, W) float32."""
    w1, b1, w2, b2, w3, b3 = params                  # HWIO conv weights
    n, cin, h, w = x_nchw.shape
    hw = h * w
    cout = w1.shape[-1]

    nb = _images_per_step(n)                         # images per grid step
    steps = n // nb
    r_in, r_out = nb * cin, nb * cout
    rows = max(r_in, r_out)

    # NCHW -> (steps, nb*CIN, H*W): a free contiguous reshape, no transpose.
    x = x_nchw.reshape(steps, r_in, hw).astype(jnp.float32)

    # (3,3,Ci,Co) HWIO -> per-tap (9, Co, Ci), then batch block-diagonal.
    w1m = jnp.transpose(w1.reshape(9, cin, cout), (0, 2, 1)).astype(jnp.float32)
    w2m = jnp.transpose(w2.reshape(9, cout, cout), (0, 2, 1)).astype(jnp.float32)
    w1bd = _block_diag(w1m, nb)                      # (9, r_out, r_in)
    w2bd = _block_diag(w2m, nb)                      # (9, r_out, r_out)

    # 1x1 conv LHS: (r_in, r_out); row b*CIN+ci holds w3 in image b's block.
    w3v = w3.reshape(cout).astype(jnp.float32)
    eye = jnp.eye(nb, dtype=jnp.float32)
    w3blk = jnp.einsum('o,bd->bdo', w3v, eye)        # (nb, nb, cout)
    w3exp = jnp.broadcast_to(w3blk[:, None, :, :],
                             (nb, cin, nb, cout)).reshape(r_in, r_out)

    # Packed biases: col0 = b1 (tiled per image), col1 = b2, col2 = b3 scalar.
    pad = rows - r_out
    b1c = jnp.pad(jnp.tile(b1.astype(jnp.float32), nb), (0, pad))
    b2c = jnp.pad(jnp.tile(b2.astype(jnp.float32), nb), (0, pad))
    b3c = jnp.full((rows,), b3.astype(jnp.float32).reshape(()))
    bias = jnp.stack([b1c, b2c, b3c], axis=1)        # (rows, 3)

    masks = _build_masks(h, w)                       # (9, hw) f32

    def const_spec(arr):
        nd = arr.ndim
        return pl.BlockSpec(arr.shape, lambda i, _nd=nd: (0,) * _nd)

    kernel = functools.partial(attention_kernel, w=w)

    out = pl.pallas_call(
        kernel,
        out_shape=jax.ShapeDtypeStruct((steps, r_in, hw), jnp.float32),
        grid=(steps,),
        in_specs=[
            pl.BlockSpec((None, r_in, hw), lambda i: (i, 0, 0)),
            const_spec(masks),
            const_spec(w1bd), const_spec(w2bd),
            const_spec(w3exp), const_spec(bias),
        ],
        out_specs=pl.BlockSpec((None, r_in, hw), lambda i: (i, 0, 0)),
        compiler_params=pltpu.CompilerParams(
            dimension_semantics=("parallel",)),
    )(x, masks, w1bd, w2bd, w3exp, bias)

    return out.reshape(n, cin, h, w)                 # NCHW, free reshape


def reference_forward(x_nchw, params):
    """Pure-JAX reference mirroring the PyTorch module."""
    w1, b1, w2, b2, w3, b3 = params
    x = jnp.transpose(x_nchw, (0, 2, 3, 1)).astype(jnp.float32)
    dims = ('NHWC', 'HWIO', 'NHWC')
    h1 = jax.nn.relu(jax.lax.conv_general_dilated(
        x, w1, (1, 1), 'SAME', dimension_numbers=dims) + b1)
    h2 = jax.nn.relu(jax.lax.conv_general_dilated(
        h1, w2, (1, 1), 'SAME', dimension_numbers=dims) + b2)
    a = jax.nn.sigmoid(jax.lax.conv_general_dilated(
        h2, w3, (1, 1), 'SAME', dimension_numbers=dims) + b3)
    y = x * a
    return jnp.transpose(y, (0, 3, 1, 2))


if __name__ == "__main__":
    key = jax.random.PRNGKey(0)
    k = jax.random.split(key, 7)
    # Deterministic synthetic params (Conv2d(in,out,3,pad=1) x2, Conv2d(out,1,1)).
    x = jax.random.normal(k[0], (N, CIN, H, W), jnp.float32)
    w1 = jax.random.normal(k[1], (3, 3, CIN, COUT), jnp.float32) * 0.1   # HWIO
    b1 = jax.random.normal(k[2], (COUT,), jnp.float32) * 0.1
    w2 = jax.random.normal(k[3], (3, 3, COUT, COUT), jnp.float32) * 0.1  # HWIO
    b2 = jax.random.normal(k[4], (COUT,), jnp.float32) * 0.1
    w3 = jax.random.normal(k[5], (1, 1, COUT, 1), jnp.float32) * 0.1     # HWIO
    b3 = jax.random.normal(k[6], (1,), jnp.float32) * 0.1
    params = (w1, b1, w2, b2, w3, b3)

    y = attention_forward(x, params)
    jax.block_until_ready(y)

    y_ref = reference_forward(x, params)
    np.testing.assert_allclose(np.asarray(y), np.asarray(y_ref),
                               rtol=1e-4, atol=1e-4)
    print("KERNEL_OK")
</pallas_src>

<mosaic_0001>
module attributes {stable_mosaic.version = 11 : i64} {
  func.func @attention_kernel(%arg0: i32, %arg1: memref<1x8x256xf32, #tpu.memory_space<vmem>>, %arg2: memref<9x256xf32, #tpu.memory_space<vmem>>, %arg3: memref<9x16x8xf32, #tpu.memory_space<vmem>>, %arg4: memref<9x16x16xf32, #tpu.memory_space<vmem>>, %arg5: memref<8x16xf32, #tpu.memory_space<vmem>>, %arg6: memref<16x3xf32, #tpu.memory_space<vmem>>, %arg7: memref<1x8x256xf32, #tpu.memory_space<vmem>>) attributes {dimension_semantics = [#tpu.dimension_semantics<parallel>], iteration_bounds = array<i64: 1>, scalar_prefetch = 0 : i64, scratch_operands = 0 : i64, tpu.core_type = #tpu.core_type<tc>, window_params = [{transform_indices = @transform_0, window_bounds = array<i64: 1, 8, 256>}, {pipeline_mode = #tpu.pipeline_mode<synchronous>, transform_indices = @transform_1, window_bounds = array<i64: 9, 256>}, {pipeline_mode = #tpu.pipeline_mode<synchronous>, transform_indices = @transform_2, window_bounds = array<i64: 9, 16, 8>}, {pipeline_mode = #tpu.pipeline_mode<synchronous>, transform_indices = @transform_3, window_bounds = array<i64: 9, 16, 16>}, {pipeline_mode = #tpu.pipeline_mode<synchronous>, transform_indices = @transform_4, window_bounds = array<i64: 8, 16>}, {pipeline_mode = #tpu.pipeline_mode<synchronous>, transform_indices = @transform_5, window_bounds = array<i64: 16, 3>}, {transform_indices = @transform_6, window_bounds = array<i64: 1, 8, 256>}]} {
    %c0 = arith.constant 0 : index
    %c0_0 = arith.constant 0 : index
    %c0_1 = arith.constant 0 : index
    %0 = vector.load %arg1[%c0, %c0_0, %c0_1] : memref<1x8x256xf32, #tpu.memory_space<vmem>>, vector<1x8x256xf32>
    %1 = vector.shape_cast %0 : vector<1x8x256xf32> to vector<8x256xf32>
    %c0_2 = arith.constant 0 : index
    %c0_3 = arith.constant 0 : index
    %2 = vector.load %arg6[%c0_2, %c0_3] : memref<16x3xf32, #tpu.memory_space<vmem>>, vector<16x3xf32>
    %3 = vector.extract_strided_slice %2 {offsets = [0, 0], sizes = [16, 1], strides = [1, 1]} : vector<16x3xf32> to vector<16x1xf32>
    %4 = vector.shape_cast %3 : vector<16x1xf32> to vector<16x1xf32>
    %5 = vector.broadcast %4 : vector<16x1xf32> to vector<16x256xf32>
    %c17_i32 = arith.constant 17 : i32
    %6 = tpu.dynamic_rotate %1 by %c17_i32 dim 1 : vector<8x256xf32>, i32 -> vector<8x256xf32>
    %c0_4 = arith.constant 0 : index
    %c0_5 = arith.constant 0 : index
    %7 = vector.load %arg2[%c0_4, %c0_5] : memref<9x256xf32, #tpu.memory_space<vmem>>, vector<1x256xf32>
    %8 = vector.broadcast %7 : vector<1x256xf32> to vector<8x256xf32>
    %9 = arith.mulf %6, %8 : vector<8x256xf32>
    %c0_6 = arith.constant 0 : index
    %c0_7 = arith.constant 0 : index
    %c0_8 = arith.constant 0 : index
    %10 = vector.load %arg3[%c0_6, %c0_7, %c0_8] : memref<9x16x8xf32, #tpu.memory_space<vmem>>, vector<1x16x8xf32>
    %11 = vector.shape_cast %10 : vector<1x16x8xf32> to vector<16x8xf32>
    %cst = arith.constant dense<0.000000e+00> : vector<16x256xf32>
    %12 = tpu.matmul %11, %9, %cst {dimension_numbers = #tpu.dot_dimension_numbers<[1], [0], [0], [1], [0, 0, 1, 1], [], []>} : vector<16x8xf32>, vector<8x256xf32>, vector<16x256xf32> -> vector<16x256xf32>
    %13 = arith.addf %5, %12 : vector<16x256xf32>
    %c16_i32 = arith.constant 16 : i32
    %14 = tpu.dynamic_rotate %1 by %c16_i32 dim 1 : vector<8x256xf32>, i32 -> vector<8x256xf32>
    %c1 = arith.constant 1 : index
    %c0_9 = arith.constant 0 : index
    %15 = vector.load %arg2[%c1, %c0_9] : memref<9x256xf32, #tpu.memory_space<vmem>>, vector<1x256xf32>
    %16 = vector.broadcast %15 : vector<1x256xf32> to vector<8x256xf32>
    %17 = arith.mulf %14, %16 : vector<8x256xf32>
    %c1_10 = arith.constant 1 : index
    %c0_11 = arith.constant 0 : index
    %c0_12 = arith.constant 0 : index
    %18 = vector.load %arg3[%c1_10, %c0_11, %c0_12] : memref<9x16x8xf32, #tpu.memory_space<vmem>>, vector<1x16x8xf32>
    %19 = vector.shape_cast %18 : vector<1x16x8xf32> to vector<16x8xf32>
    %cst_13 = arith.constant dense<0.000000e+00> : vector<16x256xf32>
    %20 = tpu.matmul %19, %17, %cst_13 {dimension_numbers = #tpu.dot_dimension_numbers<[1], [0], [0], [1], [0, 0, 1, 1], [], []>} : vector<16x8xf32>, vector<8x256xf32>, vector<16x256xf32> -> vector<16x256xf32>
    %21 = arith.addf %13, %20 : vector<16x256xf32>
    %c15_i32 = arith.constant 15 : i32
    %22 = tpu.dynamic_rotate %1 by %c15_i32 dim 1 : vector<8x256xf32>, i32 -> vector<8x256xf32>
    %c2 = arith.constant 2 : index
    %c0_14 = arith.constant 0 : index
    %23 = vector.load %arg2[%c2, %c0_14] : memref<9x256xf32, #tpu.memory_space<vmem>>, vector<1x256xf32>
    %24 = vector.broadcast %23 : vector<1x256xf32> to vector<8x256xf32>
    %25 = arith.mulf %22, %24 : vector<8x256xf32>
    %c2_15 = arith.constant 2 : index
    %c0_16 = arith.constant 0 : index
    %c0_17 = arith.constant 0 : index
    %26 = vector.load %arg3[%c2_15, %c0_16, %c0_17] : memref<9x16x8xf32, #tpu.memory_space<vmem>>, vector<1x16x8xf32>
    %27 = vector.shape_cast %26 : vector<1x16x8xf32> to vector<16x8xf32>
    %cst_18 = arith.constant dense<0.000000e+00> : vector<16x256xf32>
    %28 = tpu.matmul %27, %25, %cst_18 {dimension_numbers = #tpu.dot_dimension_numbers<[1], [0], [0], [1], [0, 0, 1, 1], [], []>} : vector<16x8xf32>, vector<8x256xf32>, vector<16x256xf32> -> vector<16x256xf32>
    %29 = arith.addf %21, %28 : vector<16x256xf32>
    %c1_i32 = arith.constant 1 : i32
    %30 = tpu.dynamic_rotate %1 by %c1_i32 dim 1 : vector<8x256xf32>, i32 -> vector<8x256xf32>
    %c3 = arith.constant 3 : index
    %c0_19 = arith.constant 0 : index
    %31 = vector.load %arg2[%c3, %c0_19] : memref<9x256xf32, #tpu.memory_space<vmem>>, vector<1x256xf32>
    %32 = vector.broadcast %31 : vector<1x256xf32> to vector<8x256xf32>
    %33 = arith.mulf %30, %32 : vector<8x256xf32>
    %c3_20 = arith.constant 3 : index
    %c0_21 = arith.constant 0 : index
    %c0_22 = arith.constant 0 : index
    %34 = vector.load %arg3[%c3_20, %c0_21, %c0_22] : memref<9x16x8xf32, #tpu.memory_space<vmem>>, vector<1x16x8xf32>
    %35 = vector.shape_cast %34 : vector<1x16x8xf32> to vector<16x8xf32>
    %cst_23 = arith.constant dense<0.000000e+00> : vector<16x256xf32>
    %36 = tpu.matmul %35, %33, %cst_23 {dimension_numbers = #tpu.dot_dimension_numbers<[1], [0], [0], [1], [0, 0, 1, 1], [], []>} : vector<16x8xf32>, vector<8x256xf32>, vector<16x256xf32> -> vector<16x256xf32>
    %37 = arith.addf %29, %36 : vector<16x256xf32>
    %c4 = arith.constant 4 : index
    %c0_24 = arith.constant 0 : index
    %c0_25 = arith.constant 0 : index
    %38 = vector.load %arg3[%c4, %c0_24, %c0_25] : memref<9x16x8xf32, #tpu.memory_space<vmem>>, vector<1x16x8xf32>
    %39 = vector.shape_cast %38 : vector<1x16x8xf32> to vector<16x8xf32>
    %cst_26 = arith.constant dense<0.000000e+00> : vector<16x256xf32>
    %40 = tpu.matmul %39, %1, %cst_26 {dimension_numbers = #tpu.dot_dimension_numbers<[1], [0], [0], [1], [0, 0, 1, 1], [], []>} : vector<16x8xf32>, vector<8x256xf32>, vector<16x256xf32> -> vector<16x256xf32>
    %41 = arith.addf %37, %40 : vector<16x256xf32>
    %c255_i32 = arith.constant 255 : i32
    %42 = tpu.dynamic_rotate %1 by %c255_i32 dim 1 : vector<8x256xf32>, i32 -> vector<8x256xf32>
    %c5 = arith.constant 5 : index
    %c0_27 = arith.constant 0 : index
    %43 = vector.load %arg2[%c5, %c0_27] : memref<9x256xf32, #tpu.memory_space<vmem>>, vector<1x256xf32>
    %44 = vector.broadcast %43 : vector<1x256xf32> to vector<8x256xf32>
    %45 = arith.mulf %42, %44 : vector<8x256xf32>
    %c5_28 = arith.constant 5 : index
    %c0_29 = arith.constant 0 : index
    %c0_30 = arith.constant 0 : index
    %46 = vector.load %arg3[%c5_28, %c0_29, %c0_30] : memref<9x16x8xf32, #tpu.memory_space<vmem>>, vector<1x16x8xf32>
    %47 = vector.shape_cast %46 : vector<1x16x8xf32> to vector<16x8xf32>
    %cst_31 = arith.constant dense<0.000000e+00> : vector<16x256xf32>
    %48 = tpu.matmul %47, %45, %cst_31 {dimension_numbers = #tpu.dot_dimension_numbers<[1], [0], [0], [1], [0, 0, 1, 1], [], []>} : vector<16x8xf32>, vector<8x256xf32>, vector<16x256xf32> -> vector<16x256xf32>
    %49 = arith.addf %41, %48 : vector<16x256xf32>
    %c241_i32 = arith.constant 241 : i32
    %50 = tpu.dynamic_rotate %1 by %c241_i32 dim 1 : vector<8x256xf32>, i32 -> vector<8x256xf32>
    %c6 = arith.constant 6 : index
    %c0_32 = arith.constant 0 : index
    %51 = vector.load %arg2[%c6, %c0_32] : memref<9x256xf32, #tpu.memory_space<vmem>>, vector<1x256xf32>
    %52 = vector.broadcast %51 : vector<1x256xf32> to vector<8x256xf32>
    %53 = arith.mulf %50, %52 : vector<8x256xf32>
    %c6_33 = arith.constant 6 : index
    %c0_34 = arith.constant 0 : index
    %c0_35 = arith.constant 0 : index
    %54 = vector.load %arg3[%c6_33, %c0_34, %c0_35] : memref<9x16x8xf32, #tpu.memory_space<vmem>>, vector<1x16x8xf32>
    %55 = vector.shape_cast %54 : vector<1x16x8xf32> to vector<16x8xf32>
    %cst_36 = arith.constant dense<0.000000e+00> : vector<16x256xf32>
    %56 = tpu.matmul %55, %53, %cst_36 {dimension_numbers = #tpu.dot_dimension_numbers<[1], [0], [0], [1], [0, 0, 1, 1], [], []>} : vector<16x8xf32>, vector<8x256xf32>, vector<16x256xf32> -> vector<16x256xf32>
    %57 = arith.addf %49, %56 : vector<16x256xf32>
    %c240_i32 = arith.constant 240 : i32
    %58 = tpu.dynamic_rotate %1 by %c240_i32 dim 1 : vector<8x256xf32>, i32 -> vector<8x256xf32>
    %c7 = arith.constant 7 : index
    %c0_37 = arith.constant 0 : index
    %59 = vector.load %arg2[%c7, %c0_37] : memref<9x256xf32, #tpu.memory_space<vmem>>, vector<1x256xf32>
    %60 = vector.broadcast %59 : vector<1x256xf32> to vector<8x256xf32>
    %61 = arith.mulf %58, %60 : vector<8x256xf32>
    %c7_38 = arith.constant 7 : index
    %c0_39 = arith.constant 0 : index
    %c0_40 = arith.constant 0 : index
    %62 = vector.load %arg3[%c7_38, %c0_39, %c0_40] : memref<9x16x8xf32, #tpu.memory_space<vmem>>, vector<1x16x8xf32>
    %63 = vector.shape_cast %62 : vector<1x16x8xf32> to vector<16x8xf32>
    %cst_41 = arith.constant dense<0.000000e+00> : vector<16x256xf32>
    %64 = tpu.matmul %63, %61, %cst_41 {dimension_numbers = #tpu.dot_dimension_numbers<[1], [0], [0], [1], [0, 0, 1, 1], [], []>} : vector<16x8xf32>, vector<8x256xf32>, vector<16x256xf32> -> vector<16x256xf32>
    %65 = arith.addf %57, %64 : vector<16x256xf32>
    %c239_i32 = arith.constant 239 : i32
    %66 = tpu.dynamic_rotate %1 by %c239_i32 dim 1 : vector<8x256xf32>, i32 -> vector<8x256xf32>
    %c8 = arith.constant 8 : index
    %c0_42 = arith.constant 0 : index
    %67 = vector.load %arg2[%c8, %c0_42] : memref<9x256xf32, #tpu.memory_space<vmem>>, vector<1x256xf32>
    %68 = vector.broadcast %67 : vector<1x256xf32> to vector<8x256xf32>
    %69 = arith.mulf %66, %68 : vector<8x256xf32>
    %c8_43 = arith.constant 8 : index
    %c0_44 = arith.constant 0 : index
    %c0_45 = arith.constant 0 : index
    %70 = vector.load %arg3[%c8_43, %c0_44, %c0_45] : memref<9x16x8xf32, #tpu.memory_space<vmem>>, vector<1x16x8xf32>
    %71 = vector.shape_cast %70 : vector<1x16x8xf32> to vector<16x8xf32>
    %cst_46 = arith.constant dense<0.000000e+00> : vector<16x256xf32>
    %72 = tpu.matmul %71, %69, %cst_46 {dimension_numbers = #tpu.dot_dimension_numbers<[1], [0], [0], [1], [0, 0, 1, 1], [], []>} : vector<16x8xf32>, vector<8x256xf32>, vector<16x256xf32> -> vector<16x256xf32>
    %73 = arith.addf %65, %72 : vector<16x256xf32>
    %cst_47 = arith.constant 0.000000e+00 : f32
    %74 = vector.broadcast %cst_47 : f32 to vector<16x256xf32>
    %75 = arith.maximumf %73, %74 : vector<16x256xf32>
    %76 = vector.extract_strided_slice %2 {offsets = [0, 1], sizes = [16, 1], strides = [1, 1]} : vector<16x3xf32> to vector<16x1xf32>
    %77 = vector.shape_cast %76 : vector<16x1xf32> to vector<16x1xf32>
    %78 = vector.broadcast %77 : vector<16x1xf32> to vector<16x256xf32>
    %c17_i32_48 = arith.constant 17 : i32
    %79 = tpu.dynamic_rotate %75 by %c17_i32_48 dim 1 : vector<16x256xf32>, i32 -> vector<16x256xf32>
    %c0_49 = arith.constant 0 : index
    %c0_50 = arith.constant 0 : index
    %80 = vector.load %arg2[%c0_49, %c0_50] : memref<9x256xf32, #tpu.memory_space<vmem>>, vector<1x256xf32>
    %81 = vector.broadcast %80 : vector<1x256xf32> to vector<16x256xf32>
    %82 = arith.mulf %79, %81 : vector<16x256xf32>
    %c0_51 = arith.constant 0 : index
    %c0_52 = arith.constant 0 : index
    %c0_53 = arith.constant 0 : index
    %83 = vector.load %arg4[%c0_51, %c0_52, %c0_53] : memref<9x16x16xf32, #tpu.memory_space<vmem>>, vector<1x16x16xf32>
    %84 = vector.shape_cast %83 : vector<1x16x16xf32> to vector<16x16xf32>
    %cst_54 = arith.constant dense<0.000000e+00> : vector<16x256xf32>
    %85 = tpu.matmul %84, %82, %cst_54 {dimension_numbers = #tpu.dot_dimension_numbers<[1], [0], [0], [1], [0, 0, 1, 1], [], []>} : vector<16x16xf32>, vector<16x256xf32>, vector<16x256xf32> -> vector<16x256xf32>
    %86 = arith.addf %78, %85 : vector<16x256xf32>
    %c16_i32_55 = arith.constant 16 : i32
    %87 = tpu.dynamic_rotate %75 by %c16_i32_55 dim 1 : vector<16x256xf32>, i32 -> vector<16x256xf32>
    %c1_56 = arith.constant 1 : index
    %c0_57 = arith.constant 0 : index
    %88 = vector.load %arg2[%c1_56, %c0_57] : memref<9x256xf32, #tpu.memory_space<vmem>>, vector<1x256xf32>
    %89 = vector.broadcast %88 : vector<1x256xf32> to vector<16x256xf32>
    %90 = arith.mulf %87, %89 : vector<16x256xf32>
    %c1_58 = arith.constant 1 : index
    %c0_59 = arith.constant 0 : index
    %c0_60 = arith.constant 0 : index
    %91 = vector.load %arg4[%c1_58, %c0_59, %c0_60] : memref<9x16x16xf32, #tpu.memory_space<vmem>>, vector<1x16x16xf32>
    %92 = vector.shape_cast %91 : vector<1x16x16xf32> to vector<16x16xf32>
    %cst_61 = arith.constant dense<0.000000e+00> : vector<16x256xf32>
    %93 = tpu.matmul %92, %90, %cst_61 {dimension_numbers = #tpu.dot_dimension_numbers<[1], [0], [0], [1], [0, 0, 1, 1], [], []>} : vector<16x16xf32>, vector<16x256xf32>, vector<16x256xf32> -> vector<16x256xf32>
    %94 = arith.addf %86, %93 : vector<16x256xf32>
    %c15_i32_62 = arith.constant 15 : i32
    %95 = tpu.dynamic_rotate %75 by %c15_i32_62 dim 1 : vector<16x256xf32>, i32 -> vector<16x256xf32>
    %c2_63 = arith.constant 2 : index
    %c0_64 = arith.constant 0 : index
    %96 = vector.load %arg2[%c2_63, %c0_64] : memref<9x256xf32, #tpu.memory_space<vmem>>, vector<1x256xf32>
    %97 = vector.broadcast %96 : vector<1x256xf32> to vector<16x256xf32>
    %98 = arith.mulf %95, %97 : vector<16x256xf32>
    %c2_65 = arith.constant 2 : index
    %c0_66 = arith.constant 0 : index
    %c0_67 = arith.constant 0 : index
    %99 = vector.load %arg4[%c2_65, %c0_66, %c0_67] : memref<9x16x16xf32, #tpu.memory_space<vmem>>, vector<1x16x16xf32>
    %100 = vector.shape_cast %99 : vector<1x16x16xf32> to vector<16x16xf32>
    %cst_68 = arith.constant dense<0.000000e+00> : vector<16x256xf32>
    %101 = tpu.matmul %100, %98, %cst_68 {dimension_numbers = #tpu.dot_dimension_numbers<[1], [0], [0], [1], [0, 0, 1, 1], [], []>} : vector<16x16xf32>, vector<16x256xf32>, vector<16x256xf32> -> vector<16x256xf32>
    %102 = arith.addf %94, %101 : vector<16x256xf32>
    %c1_i32_69 = arith.constant 1 : i32
    %103 = tpu.dynamic_rotate %75 by %c1_i32_69 dim 1 : vector<16x256xf32>, i32 -> vector<16x256xf32>
    %c3_70 = arith.constant 3 : index
    %c0_71 = arith.constant 0 : index
    %104 = vector.load %arg2[%c3_70, %c0_71] : memref<9x256xf32, #tpu.memory_space<vmem>>, vector<1x256xf32>
    %105 = vector.broadcast %104 : vector<1x256xf32> to vector<16x256xf32>
    %106 = arith.mulf %103, %105 : vector<16x256xf32>
    %c3_72 = arith.constant 3 : index
    %c0_73 = arith.constant 0 : index
    %c0_74 = arith.constant 0 : index
    %107 = vector.load %arg4[%c3_72, %c0_73, %c0_74] : memref<9x16x16xf32, #tpu.memory_space<vmem>>, vector<1x16x16xf32>
    %108 = vector.shape_cast %107 : vector<1x16x16xf32> to vector<16x16xf32>
    %cst_75 = arith.constant dense<0.000000e+00> : vector<16x256xf32>
    %109 = tpu.matmul %108, %106, %cst_75 {dimension_numbers = #tpu.dot_dimension_numbers<[1], [0], [0], [1], [0, 0, 1, 1], [], []>} : vector<16x16xf32>, vector<16x256xf32>, vector<16x256xf32> -> vector<16x256xf32>
    %110 = arith.addf %102, %109 : vector<16x256xf32>
    %c4_76 = arith.constant 4 : index
    %c0_77 = arith.constant 0 : index
    %c0_78 = arith.constant 0 : index
    %111 = vector.load %arg4[%c4_76, %c0_77, %c0_78] : memref<9x16x16xf32, #tpu.memory_space<vmem>>, vector<1x16x16xf32>
    %112 = vector.shape_cast %111 : vector<1x16x16xf32> to vector<16x16xf32>
    %cst_79 = arith.constant dense<0.000000e+00> : vector<16x256xf32>
    %113 = tpu.matmul %112, %75, %cst_79 {dimension_numbers = #tpu.dot_dimension_numbers<[1], [0], [0], [1], [0, 0, 1, 1], [], []>} : vector<16x16xf32>, vector<16x256xf32>, vector<16x256xf32> -> vector<16x256xf32>
    %114 = arith.addf %110, %113 : vector<16x256xf32>
    %c255_i32_80 = arith.constant 255 : i32
    %115 = tpu.dynamic_rotate %75 by %c255_i32_80 dim 1 : vector<16x256xf32>, i32 -> vector<16x256xf32>
    %c5_81 = arith.constant 5 : index
    %c0_82 = arith.constant 0 : index
    %116 = vector.load %arg2[%c5_81, %c0_82] : memref<9x256xf32, #tpu.memory_space<vmem>>, vector<1x256xf32>
    %117 = vector.broadcast %116 : vector<1x256xf32> to vector<16x256xf32>
    %118 = arith.mulf %115, %117 : vector<16x256xf32>
    %c5_83 = arith.constant 5 : index
    %c0_84 = arith.constant 0 : index
    %c0_85 = arith.constant 0 : index
    %119 = vector.load %arg4[%c5_83, %c0_84, %c0_85] : memref<9x16x16xf32, #tpu.memory_space<vmem>>, vector<1x16x16xf32>
    %120 = vector.shape_cast %119 : vector<1x16x16xf32> to vector<16x16xf32>
    %cst_86 = arith.constant dense<0.000000e+00> : vector<16x256xf32>
    %121 = tpu.matmul %120, %118, %cst_86 {dimension_numbers = #tpu.dot_dimension_numbers<[1], [0], [0], [1], [0, 0, 1, 1], [], []>} : vector<16x16xf32>, vector<16x256xf32>, vector<16x256xf32> -> vector<16x256xf32>
    %122 = arith.addf %114, %121 : vector<16x256xf32>
    %c241_i32_87 = arith.constant 241 : i32
    %123 = tpu.dynamic_rotate %75 by %c241_i32_87 dim 1 : vector<16x256xf32>, i32 -> vector<16x256xf32>
    %c6_88 = arith.constant 6 : index
    %c0_89 = arith.constant 0 : index
    %124 = vector.load %arg2[%c6_88, %c0_89] : memref<9x256xf32, #tpu.memory_space<vmem>>, vector<1x256xf32>
    %125 = vector.broadcast %124 : vector<1x256xf32> to vector<16x256xf32>
    %126 = arith.mulf %123, %125 : vector<16x256xf32>
    %c6_90 = arith.constant 6 : index
    %c0_91 = arith.constant 0 : index
    %c0_92 = arith.constant 0 : index
    %127 = vector.load %arg4[%c6_90, %c0_91, %c0_92] : memref<9x16x16xf32, #tpu.memory_space<vmem>>, vector<1x16x16xf32>
    %128 = vector.shape_cast %127 : vector<1x16x16xf32> to vector<16x16xf32>
    %cst_93 = arith.constant dense<0.000000e+00> : vector<16x256xf32>
    %129 = tpu.matmul %128, %126, %cst_93 {dimension_numbers = #tpu.dot_dimension_numbers<[1], [0], [0], [1], [0, 0, 1, 1], [], []>} : vector<16x16xf32>, vector<16x256xf32>, vector<16x256xf32> -> vector<16x256xf32>
    %130 = arith.addf %122, %129 : vector<16x256xf32>
    %c240_i32_94 = arith.constant 240 : i32
    %131 = tpu.dynamic_rotate %75 by %c240_i32_94 dim 1 : vector<16x256xf32>, i32 -> vector<16x256xf32>
    %c7_95 = arith.constant 7 : index
    %c0_96 = arith.constant 0 : index
    %132 = vector.load %arg2[%c7_95, %c0_96] : memref<9x256xf32, #tpu.memory_space<vmem>>, vector<1x256xf32>
    %133 = vector.broadcast %132 : vector<1x256xf32> to vector<16x256xf32>
    %134 = arith.mulf %131, %133 : vector<16x256xf32>
    %c7_97 = arith.constant 7 : index
    %c0_98 = arith.constant 0 : index
    %c0_99 = arith.constant 0 : index
    %135 = vector.load %arg4[%c7_97, %c0_98, %c0_99] : memref<9x16x16xf32, #tpu.memory_space<vmem>>, vector<1x16x16xf32>
    %136 = vector.shape_cast %135 : vector<1x16x16xf32> to vector<16x16xf32>
    %cst_100 = arith.constant dense<0.000000e+00> : vector<16x256xf32>
    %137 = tpu.matmul %136, %134, %cst_100 {dimension_numbers = #tpu.dot_dimension_numbers<[1], [0], [0], [1], [0, 0, 1, 1], [], []>} : vector<16x16xf32>, vector<16x256xf32>, vector<16x256xf32> -> vector<16x256xf32>
    %138 = arith.addf %130, %137 : vector<16x256xf32>
    %c239_i32_101 = arith.constant 239 : i32
    %139 = tpu.dynamic_rotate %75 by %c239_i32_101 dim 1 : vector<16x256xf32>, i32 -> vector<16x256xf32>
    %c8_102 = arith.constant 8 : index
    %c0_103 = arith.constant 0 : index
    %140 = vector.load %arg2[%c8_102, %c0_103] : memref<9x256xf32, #tpu.memory_space<vmem>>, vector<1x256xf32>
    %141 = vector.broadcast %140 : vector<1x256xf32> to vector<16x256xf32>
    %142 = arith.mulf %139, %141 : vector<16x256xf32>
    %c8_104 = arith.constant 8 : index
    %c0_105 = arith.constant 0 : index
    %c0_106 = arith.constant 0 : index
    %143 = vector.load %arg4[%c8_104, %c0_105, %c0_106] : memref<9x16x16xf32, #tpu.memory_space<vmem>>, vector<1x16x16xf32>
    %144 = vector.shape_cast %143 : vector<1x16x16xf32> to vector<16x16xf32>
    %cst_107 = arith.constant dense<0.000000e+00> : vector<16x256xf32>
    %145 = tpu.matmul %144, %142, %cst_107 {dimension_numbers = #tpu.dot_dimension_numbers<[1], [0], [0], [1], [0, 0, 1, 1], [], []>} : vector<16x16xf32>, vector<16x256xf32>, vector<16x256xf32> -> vector<16x256xf32>
    %146 = arith.addf %138, %145 : vector<16x256xf32>
    %cst_108 = arith.constant 0.000000e+00 : f32
    %147 = vector.broadcast %cst_108 : f32 to vector<16x256xf32>
    %148 = arith.maximumf %146, %147 : vector<16x256xf32>
    %c0_109 = arith.constant 0 : index
    %c0_110 = arith.constant 0 : index
    %149 = vector.load %arg5[%c0_109, %c0_110] : memref<8x16xf32, #tpu.memory_space<vmem>>, vector<8x16xf32>
    %cst_111 = arith.constant dense<0.000000e+00> : vector<8x256xf32>
    %150 = tpu.matmul %149, %148, %cst_111 {dimension_numbers = #tpu.dot_dimension_numbers<[1], [0], [0], [1], [0, 0, 1, 1], [], []>} : vector<8x16xf32>, vector<16x256xf32>, vector<8x256xf32> -> vector<8x256xf32>
    %151 = vector.extract_strided_slice %2 {offsets = [0, 2], sizes = [8, 1], strides = [1, 1]} : vector<16x3xf32> to vector<8x1xf32>
    %152 = vector.broadcast %151 : vector<8x1xf32> to vector<8x256xf32>
    %153 = arith.addf %150, %152 : vector<8x256xf32>
    %154 = arith.negf %153 : vector<8x256xf32>
    %155 = math.exp %154 : vector<8x256xf32>
    %cst_112 = arith.constant 1.000000e+00 : f32
    %156 = vector.broadcast %cst_112 : f32 to vector<8x256xf32>
    %157 = arith.addf %156, %155 : vector<8x256xf32>
    %158 = arith.divf %156, %157 : vector<8x256xf32>
    %159 = arith.mulf %1, %158 : vector<8x256xf32>
    %c0_113 = arith.constant 0 : index
    %c0_114 = arith.constant 0 : index
    %c0_115 = arith.constant 0 : index
    %160 = vector.load %arg7[%c0_113, %c0_114, %c0_115] : memref<1x8x256xf32, #tpu.memory_space<vmem>>, vector<1x8x256xf32>
    %161 = vector.shape_cast %160 : vector<1x8x256xf32> to vector<8x256xf32>
    %162 = vector.shape_cast %159 : vector<8x256xf32> to vector<1x8x256xf32>
    tpu.vector_store %arg7[%c0_113, %c0_114, %c0_115], %162 {strides = array<i32>} : memref<1x8x256xf32, #tpu.memory_space<vmem>>, vector<1x8x256xf32>,
    return
  }
  func.func @transform_0(%arg0: i32) -> (i32, i32, i32) {
    %c0_i32 = arith.constant 0 : i32
    %c0_i32_0 = arith.constant 0 : i32
    %c0_i32_1 = arith.constant 0 : i32
    return %arg0, %c0_i32, %c0_i32_0 : i32, i32, i32
  }
  func.func @transform_1(%arg0: i32) -> (i32, i32) {
    %c0_i32 = arith.constant 0 : i32
    %c0_i32_0 = arith.constant 0 : i32
    %c0_i32_1 = arith.constant 0 : i32
    return %c0_i32, %c0_i32_0 : i32, i32
  }
  func.func @transform_2(%arg0: i32) -> (i32, i32, i32) {
    %c0_i32 = arith.constant 0 : i32
    %c0_i32_0 = arith.constant 0 : i32
    %c0_i32_1 = arith.constant 0 : i32
    %c0_i32_2 = arith.constant 0 : i32
    return %c0_i32, %c0_i32_0, %c0_i32_1 : i32, i32, i32
  }
  func.func @transform_3(%arg0: i32) -> (i32, i32, i32) {
    %c0_i32 = arith.constant 0 : i32
    %c0_i32_0 = arith.constant 0 : i32
    %c0_i32_1 = arith.constant 0 : i32
    %c0_i32_2 = arith.constant 0 : i32
    return %c0_i32, %c0_i32_0, %c0_i32_1 : i32, i32, i32
  }
  func.func @transform_4(%arg0: i32) -> (i32, i32) {
    %c0_i32 = arith.constant 0 : i32
    %c0_i32_0 = arith.constant 0 : i32
    %c0_i32_1 = arith.constant 0 : i32
    return %c0_i32, %c0_i32_0 : i32, i32
  }
  func.func @transform_5(%arg0: i32) -> (i32, i32) {
    %c0_i32 = arith.constant 0 : i32
    %c0_i32_0 = arith.constant 0 : i32
    %c0_i32_1 = arith.constant 0 : i32
    return %c0_i32, %c0_i32_0 : i32, i32
  }
  func.func @transform_6(%arg0: i32) -> (i32, i32, i32) {
    %c0_i32 = arith.constant 0 : i32
    %c0_i32_0 = arith.constant 0 : i32
    %c0_i32_1 = arith.constant 0 : i32
    return %arg0, %c0_i32, %c0_i32_0 : i32, i32, i32
  }
}

</mosaic_0001>

<llo_original>
// kernel: tpu_custom_call.1
$region0: #{tpu_custom_call.1}
  #allocation0 [shape = 'u32[]', space=smem, size = 0x4, offset = 0x4, fixed_abs, tag = 'smem constant byte address 0x4 - core index']
  #allocation1 [shape = 'u32[144,128]{1,0:T(1,128)}', space=vmem, size = 0x12000, scoped, tag = 'internal scratch']
  %s0 = inlined_call_operand.vmem [shape: f32[1,8,256], index: 0, kind: input, shape index: {}]
  %s1 = inlined_call_operand.vmem [shape: f32[9,256], index: 1, kind: input, shape index: {}]
  %s2 = inlined_call_operand.vmem [shape: f32[9,16,8], index: 2, kind: input, shape index: {}]
  %s3 = inlined_call_operand.vmem [shape: f32[9,16,16], index: 3, kind: input, shape index: {}]
  %s4 = inlined_call_operand.vmem [shape: f32[8,16], index: 4, kind: input, shape index: {}]
  %s5 = inlined_call_operand.vmem [shape: f32[16,3], index: 5, kind: input, shape index: {}]
  %s6 = inlined_call_operand.hbm [shape: f32[1,8,256], index: 6, kind: output, shape index: {}]
  %s7 = sld [smem:[#allocation0]]
  $region34: #{tpu_custom_call.1} parent=0
    _
  %s9 = ssub.s32 1, %s7
  %s10 = scalar_select 0, %s9, %s7
  $region1: #{tpu_custom_call.1} parent=0
    #allocation2 [shape = 'u8[8192]{0}', space=vmem, size = 0x2000, scoped, tag = 'output window, operand 0, single buffered']
    #allocation3 [shape = 's32[1]{0}', space=sflag, size = 0x4, scoped, tag = 'scoped memory for tpu_custom_call.1']
    %11 = vsyncpa [#allocation3], 0
    // Predicated region
    $region2: #{tpu_custom_call.1} parent=1 // pred_check
      _
    $region3: #{tpu_custom_call.1} parent=1 // pred_check_branch
      %13 = sbr.rel (0) target = $region5
    $region4: #{tpu_custom_call.1} parent=1 // pred_region
      _
    $region5: #{tpu_custom_call.1} parent=1 // pred_fallthru
      _
    // Predicated region
    $region6: #{tpu_custom_call.1} parent=1 // pred_check
      _
    $region7: #{tpu_custom_call.1} parent=1 // pred_check_branch
      %15 = sbr.rel (0) target = $region9
    $region8: #{tpu_custom_call.1} parent=1 // pred_region
      _
    $region9: #{tpu_custom_call.1} parent=1 // pred_fallthru
      _
    // Predicated region
    $region10: #{tpu_custom_call.1} parent=1 // pred_check
      _
    $region11: #{tpu_custom_call.1} parent=1 // pred_check_branch
      %17 = sbr.rel (0) target = $region13
    $region12: #{tpu_custom_call.1} parent=1 // pred_region
      _
    $region13: #{tpu_custom_call.1} parent=1 // pred_fallthru
      _
    // Predicated region
    $region14: #{tpu_custom_call.1} parent=1 // pred_check
      _
    $region15: #{tpu_custom_call.1} parent=1 // pred_check_branch
      %19 = sbr.rel (0) target = $region17
    $region16: #{tpu_custom_call.1} parent=1 // pred_region
      _
    $region17: #{tpu_custom_call.1} parent=1 // pred_fallthru
      _
    // Predicated region
    $region18: #{tpu_custom_call.1} parent=1 // pred_check
      _
    $region19: #{tpu_custom_call.1} parent=1 // pred_check_branch
      %21 = sbr.rel (0) target = $region21
    $region20: #{tpu_custom_call.1} parent=1 // pred_region
      _
    $region21: #{tpu_custom_call.1} parent=1 // pred_fallthru
      _
    // Predicated region
    $region22: #{tpu_custom_call.1} parent=1 // pred_check
      _
    $region23: #{tpu_custom_call.1} parent=1 // pred_check_branch
      %23 = sbr.rel (0) target = $region25
    $region24: #{tpu_custom_call.1} parent=1 // pred_region
      _
    $region25: #{tpu_custom_call.1} parent=1 // pred_fallthru
      _
    %v24 = vld [vmem:[%s0] sm:$0xff]
    %v25 = vld [vmem:[%s0 + $0x8] sm:$0xff]
    %v26 = vld [vmem:[%s5] sm:$0xff]
    %v27 = vld [vmem:[%s5 + $0x8] sm:$0xff]
    %29 = vset.pattern.permute.xlu0 0
    %30 = vperm.xlu0 %29, %v26
    %v31 = vpop.permute.xlu0 %30
    %34 = vset.pattern.permute.xlu0 0
    %35 = vperm.xlu0 %34, %v27
    %v36 = vpop.permute.xlu0 %35
    %38 = vrot.lane.b32.xlu0 %v24, 17
    %v39 = vpop.permute.xlu0 %38
    %40 = vrot.lane.b32.xlu0 %v25, 17
    %v41 = vpop.permute.xlu0 %40
    %v42 = vlaneseq
    %v43 = vand.u32 %v42, 127
    %vm44 = vcmp.lt.s32.totalorder %v43, 17
    %v45 = vsel %vm44, %v39, %v41
    %v46 = vsel %vm44, %v41, %v39
    %v47 = vld [vmem:[%s1] ss:$8 sm:$0x3]
    %v49 = vlaneseq
    %v50 = vshrl.u32 %v49, 7
    %v51 = vsub.s32 0, %v50
    %v52 = vrot.slane %v47, %v51
    %v53 = vlaneseq
    %v54 = vshrl.u32 %v53, 7
    %v55 = vsub.s32 1, %v54
    %v56 = vrot.slane %v47, %v55
    %v59 = vmul.f32 %v46, %v52
    %v60 = vmul.f32 %v45, %v56
    %v61 = vld [vmem:[%s2] sm:$0xff]
    %v62 = vld [vmem:[%s2 + $0x8] sm:$0xff]
    %vm63 = vcmask 64512
    %v65 = vsel %vm63, %v61, 0
    %v68 = vsel %vm63, %v62, 0
    %70 = vmatprep.subr.mxu0 0.0
    %71 = vmatpush1.msra.mxu0 0.0
    %72 = vmatprep.subr.mxu0 0.0
    %73 = vmatpush1.msra.mxu0 0.0
    %74 = vmatprep.subr.mxu0 0.0
    %75 = vmatpush1.msra.mxu0 0.0
    %76 = vmatprep.subr.mxu0 0.0
    %77 = vmatpush1.msra.mxu0 0.0
    %78 = vmatprep.subr.mxu0 0.0
    %79 = vmatpush1.msra.mxu0 0.0
    %80 = vmatprep.subr.mxu0 0.0
    %81 = vmatpush1.msra.mxu0 0.0
    %82 = vmatprep.subr.mxu0 0.0
    %83 = vmatpush1.msra.mxu0 0.0
    %84 = vmatprep.subr.mxu0 0.0
    %85 = vmatpush1.msra.mxu0 0.0
    %86 = vmatprep.subr.mxu0 0.0
    %87 = vmatpush1.msra.mxu0 0.0
    %88 = vmatprep.subr.mxu0 0.0
    %89 = vmatpush1.msra.mxu0 0.0
    %90 = vmatprep.subr.mxu0 0.0
    %91 = vmatpush1.msra.mxu0 0.0
    %92 = vmatprep.subr.mxu0 0.0
    %93 = vmatpush1.msra.mxu0 0.0
    %94 = vmatprep.subr.mxu0 0.0
    %95 = vmatpush1.msra.mxu0 0.0
    %96 = vmatprep.subr.mxu0 0.0
    %97 = vmatpush1.msra.mxu0 0.0
    %98 = vmatprep.subr.mxu0 0.0
    %99 = vmatpush1.msra.mxu0 0.0
    %100 = vmatprep.subr.mxu0 %v60
    %101 = vmatpush1.msra.mxu0 %v59
    %102 = vmatprep.subr.mxu0 0.0
    %103 = vmatpush2.msra.mxu0 0.0
    %104 = vmatprep.subr.mxu0 0.0
    %105 = vmatpush2.msra.mxu0 0.0
    %106 = vmatprep.subr.mxu0 0.0
    %107 = vmatpush2.msra.mxu0 0.0
    %108 = vmatprep.subr.mxu0 0.0
    %109 = vmatpush2.msra.mxu0 0.0
    %110 = vmatprep.subr.mxu0 0.0
    %111 = vmatpush2.msra.mxu0 0.0
    %112 = vmatprep.subr.mxu0 0.0
    %113 = vmatpush2.msra.mxu0 0.0
    %114 = vmatprep.subr.mxu0 0.0
    %115 = vmatpush2.msra.mxu0 0.0
    %116 = vmatprep.subr.mxu0 0.0
    %117 = vmatpush2.msra.mxu0 0.0
    %118 = vmatprep.subr.mxu0 0.0
    %119 = vmatpush2.msra.mxu0 0.0
    %120 = vmatprep.subr.mxu0 0.0
    %121 = vmatpush2.msra.mxu0 0.0
    %122 = vmatprep.subr.mxu0 0.0
    %123 = vmatpush2.msra.mxu0 0.0
    %124 = vmatprep.subr.mxu0 0.0
    %125 = vmatpush2.msra.mxu0 0.0
    %126 = vmatprep.subr.mxu0 0.0
    %127 = vmatpush2.msra.mxu0 0.0
    %128 = vmatprep.subr.mxu0 0.0
    %129 = vmatpush2.msra.mxu0 0.0
    %130 = vmatprep.subr.mxu0 0.0
    %131 = vmatpush2.msra.mxu0 0.0
    %132 = vmatprep.subr.mxu0 0.0
    %133 = vmatpush2.msra.mxu0 0.0
    %134 = vmatprep.mubr.f32.mxu0 0.0
    %135 = vmatmul.mubr.f32.gmra.mxu0 %v65
    %v136 = vpop.f32.mrf.mxu0
    %v137 = vadd.f32 0.0, %v136
    %v138 = vpop.f32.mrf.mxu0
    %v139 = vadd.f32 0.0, %v138
    %140 = vmatprep.mubr.f32.mxu0 0.0
    %141 = vmatmul.mubr.f32.gmra.mxu0 %v68
    %v142 = vpop.f32.mrf.mxu0
    %v143 = vadd.f32 0.0, %v142
    %v144 = vpop.f32.mrf.mxu0
    %v145 = vadd.f32 0.0, %v144
    %146 = vdwg.mxu0
    %v147 = vadd.f32 %v31, %v137
    %v148 = vadd.f32 %v31, %v139
    %v149 = vadd.f32 %v36, %v143
    %v150 = vadd.f32 %v36, %v145
    %151 = vrot.lane.b32.xlu0 %v24, 16
    %v152 = vpop.permute.xlu0 %151
    %153 = vrot.lane.b32.xlu0 %v25, 16
    %v154 = vpop.permute.xlu0 %153
    %vm155 = vcmp.lt.s32.totalorder %v43, 16
    %v156 = vsel %vm155, %v152, %v154
    %v157 = vsel %vm155, %v154, %v152
    %s158 = scalar_lea.vmem %s1, 1
    %v159 = vld [vmem:[%s158] ss:$8 sm:$0x3]
    %v161 = vlaneseq
    %v162 = vshrl.u32 %v161, 7
    %v163 = vsub.s32 0, %v162
    %v164 = vrot.slane %v159, %v163
    %v165 = vlaneseq
    %v166 = vshrl.u32 %v165, 7
    %v167 = vsub.s32 1, %v166
    %v168 = vrot.slane %v159, %v167
    %v171 = vmul.f32 %v157, %v164
    %v172 = vmul.f32 %v156, %v168
    %s173 = scalar_lea.vmem %s2, 16
    %v174 = vld [vmem:[%s173] sm:$0xff]
    %v175 = vld [vmem:[%s173 + $0x8] sm:$0xff]
    %v177 = vsel %vm63, %v174, 0
    %v180 = vsel %vm63, %v175, 0
    %182 = vmatprep.subr.mxu0 0.0
    %183 = vmatpush1.msra.mxu0 0.0
    %184 = vmatprep.subr.mxu0 0.0
    %185 = vmatpush1.msra.mxu0 0.0
    %186 = vmatprep.subr.mxu0 0.0
    %187 = vmatpush1.msra.mxu0 0.0
    %188 = vmatprep.subr.mxu0 0.0
    %189 = vmatpush1.msra.mxu0 0.0
    %190 = vmatprep.subr.mxu0 0.0
    %191 = vmatpush1.msra.mxu0 0.0
    %192 = vmatprep.subr.mxu0 0.0
    %193 = vmatpush1.msra.mxu0 0.0
    %194 = vmatprep.subr.mxu0 0.0
    %195 = vmatpush1.msra.mxu0 0.0
    %196 = vmatprep.subr.mxu0 0.0
    %197 = vmatpush1.msra.mxu0 0.0
    %198 = vmatprep.subr.mxu0 0.0
    %199 = vmatpush1.msra.mxu0 0.0
    %200 = vmatprep.subr.mxu0 0.0
    %201 = vmatpush1.msra.mxu0 0.0
    %202 = vmatprep.subr.mxu0 0.0
    %203 = vmatpush1.msra.mxu0 0.0
    %204 = vmatprep.subr.mxu0 0.0
    %205 = vmatpush1.msra.mxu0 0.0
    %206 = vmatprep.subr.mxu0 0.0
    %207 = vmatpush1.msra.mxu0 0.0
    %208 = vmatprep.subr.mxu0 0.0
    %209 = vmatpush1.msra.mxu0 0.0
    %210 = vmatprep.subr.mxu0 0.0
    %211 = vmatpush1.msra.mxu0 0.0
    %212 = vmatprep.subr.mxu0 %v172
    %213 = vmatpush1.msra.mxu0 %v171
    %214 = vmatprep.subr.mxu0 0.0
    %215 = vmatpush2.msra.mxu0 0.0
    %216 = vmatprep.subr.mxu0 0.0
    %217 = vmatpush2.msra.mxu0 0.0
    %218 = vmatprep.subr.mxu0 0.0
    %219 = vmatpush2.msra.mxu0 0.0
    %220 = vmatprep.subr.mxu0 0.0
    %221 = vmatpush2.msra.mxu0 0.0
    %222 = vmatprep.subr.mxu0 0.0
    %223 = vmatpush2.msra.mxu0 0.0
    %224 = vmatprep.subr.mxu0 0.0
    %225 = vmatpush2.msra.mxu0 0.0
    %226 = vmatprep.subr.mxu0 0.0
    %227 = vmatpush2.msra.mxu0 0.0
    %228 = vmatprep.subr.mxu0 0.0
    %229 = vmatpush2.msra.mxu0 0.0
    %230 = vmatprep.subr.mxu0 0.0
    %231 = vmatpush2.msra.mxu0 0.0
    %232 = vmatprep.subr.mxu0 0.0
    %233 = vmatpush2.msra.mxu0 0.0
    %234 = vmatprep.subr.mxu0 0.0
    %235 = vmatpush2.msra.mxu0 0.0
    %236 = vmatprep.subr.mxu0 0.0
    %237 = vmatpush2.msra.mxu0 0.0
    %238 = vmatprep.subr.mxu0 0.0
    %239 = vmatpush2.msra.mxu0 0.0
    %240 = vmatprep.subr.mxu0 0.0
    %241 = vmatpush2.msra.mxu0 0.0
    %242 = vmatprep.subr.mxu0 0.0
    %243 = vmatpush2.msra.mxu0 0.0
    %244 = vmatprep.subr.mxu0 0.0
    %245 = vmatpush2.msra.mxu0 0.0
    %246 = vmatprep.mubr.f32.mxu0 0.0
    %247 = vmatmul.mubr.f32.gmra.mxu0 %v177
    %v248 = vpop.f32.mrf.mxu0
    %v249 = vadd.f32 0.0, %v248
    %v250 = vpop.f32.mrf.mxu0
    %v251 = vadd.f32 0.0, %v250
    %252 = vmatprep.mubr.f32.mxu0 0.0
    %253 = vmatmul.mubr.f32.gmra.mxu0 %v180
    %v254 = vpop.f32.mrf.mxu0
    %v255 = vadd.f32 0.0, %v254
    %v256 = vpop.f32.mrf.mxu0
    %v257 = vadd.f32 0.0, %v256
    %258 = vdwg.mxu0
    %v259 = vadd.f32 %v147, %v249
    %v260 = vadd.f32 %v148, %v251
    %v261 = vadd.f32 %v149, %v255
    %v262 = vadd.f32 %v150, %v257
    %263 = vrot.lane.b32.xlu0 %v24, 15
    %v264 = vpop.permute.xlu0 %263
    %265 = vrot.lane.b32.xlu0 %v25, 15
    %v266 = vpop.permute.xlu0 %265
    %vm267 = vcmp.lt.s32.totalorder %v43, 15
    %v268 = vsel %vm267, %v264, %v266
    %v269 = vsel %vm267, %v266, %v264
    %s270 = scalar_lea.vmem %s1, 2
    %v271 = vld [vmem:[%s270] ss:$8 sm:$0x3]
    %v273 = vlaneseq
    %v274 = vshrl.u32 %v273, 7
    %v275 = vsub.s32 0, %v274
    %v276 = vrot.slane %v271, %v275
    %v277 = vlaneseq
    %v278 = vshrl.u32 %v277, 7
    %v279 = vsub.s32 1, %v278
    %v280 = vrot.slane %v271, %v279
    %v283 = vmul.f32 %v269, %v276
    %v284 = vmul.f32 %v268, %v280
    %s285 = scalar_lea.vmem %s2, 32
    %v286 = vld [vmem:[%s285] sm:$0xff]
    %v287 = vld [vmem:[%s285 + $0x8] sm:$0xff]
    %v289 = vsel %vm63, %v286, 0
    %v292 = vsel %vm63, %v287, 0
    %294 = vmatprep.subr.mxu0 0.0
    %295 = vmatpush1.msra.mxu0 0.0
    %296 = vmatprep.subr.mxu0 0.0
    %297 = vmatpush1.msra.mxu0 0.0
    %298 = vmatprep.subr.mxu0 0.0
    %299 = vmatpush1.msra.mxu0 0.0
    %300 = vmatprep.subr.mxu0 0.0
    %301 = vmatpush1.msra.mxu0 0.0
    %302 = vmatprep.subr.mxu0 0.0
    %303 = vmatpush1.msra.mxu0 0.0
    %304 = vmatprep.subr.mxu0 0.0
    %305 = vmatpush1.msra.mxu0 0.0
    %306 = vmatprep.subr.mxu0 0.0
    %307 = vmatpush1.msra.mxu0 0.0
    %308 = vmatprep.subr.mxu0 0.0
    %309 = vmatpush1.msra.mxu0 0.0
    %310 = vmatprep.subr.mxu0 0.0
    %311 = vmatpush1.msra.mxu0 0.0
    %312 = vmatprep.subr.mxu0 0.0
    %313 = vmatpush1.msra.mxu0 0.0
    %314 = vmatprep.subr.mxu0 0.0
    %315 = vmatpush1.msra.mxu0 0.0
    %316 = vmatprep.subr.mxu0 0.0
    %317 = vmatpush1.msra.mxu0 0.0
    %318 = vmatprep.subr.mxu0 0.0
    %319 = vmatpush1.msra.mxu0 0.0
    %320 = vmatprep.subr.mxu0 0.0
    %321 = vmatpush1.msra.mxu0 0.0
    %322 = vmatprep.subr.mxu0 0.0
    %323 = vmatpush1.msra.mxu0 0.0
    %324 = vmatprep.subr.mxu0 %v284
    %325 = vmatpush1.msra.mxu0 %v283
    %326 = vmatprep.subr.mxu0 0.0
    %327 = vmatpush2.msra.mxu0 0.0
    %328 = vmatprep.subr.mxu0 0.0
    %329 = vmatpush2.msra.mxu0 0.0
    %330 = vmatprep.subr.mxu0 0.0
    %331 = vmatpush2.msra.mxu0 0.0
    %332 = vmatprep.subr.mxu0 0.0
    %333 = vmatpush2.msra.mxu0 0.0
    %334 = vmatprep.subr.mxu0 0.0
    %335 = vmatpush2.msra.mxu0 0.0
    %336 = vmatprep.subr.mxu0 0.0
    %337 = vmatpush2.msra.mxu0 0.0
    %338 = vmatprep.subr.mxu0 0.0
    %339 = vmatpush2.msra.mxu0 0.0
    %340 = vmatprep.subr.mxu0 0.0
    %341 = vmatpush2.msra.mxu0 0.0
    %342 = vmatprep.subr.mxu0 0.0
    %343 = vmatpush2.msra.mxu0 0.0
    %344 = vmatprep.subr.mxu0 0.0
    %345 = vmatpush2.msra.mxu0 0.0
    %346 = vmatprep.subr.mxu0 0.0
    %347 = vmatpush2.msra.mxu0 0.0
    %348 = vmatprep.subr.mxu0 0.0
    %349 = vmatpush2.msra.mxu0 0.0
    %350 = vmatprep.subr.mxu0 0.0
    %351 = vmatpush2.msra.mxu0 0.0
    %352 = vmatprep.subr.mxu0 0.0
    %353 = vmatpush2.msra.mxu0 0.0
    %354 = vmatprep.subr.mxu0 0.0
    %355 = vmatpush2.msra.mxu0 0.0
    %356 = vmatprep.subr.mxu0 0.0
    %357 = vmatpush2.msra.mxu0 0.0
    %358 = vmatprep.mubr.f32.mxu0 0.0
    %359 = vmatmul.mubr.f32.gmra.mxu0 %v289
    %v360 = vpop.f32.mrf.mxu0
    %v361 = vadd.f32 0.0, %v360
    %v362 = vpop.f32.mrf.mxu0
    %v363 = vadd.f32 0.0, %v362
    %364 = vmatprep.mubr.f32.mxu0 0.0
    %365 = vmatmul.mubr.f32.gmra.mxu0 %v292
    %v366 = vpop.f32.mrf.mxu0
    %v367 = vadd.f32 0.0, %v366
    %v368 = vpop.f32.mrf.mxu0
    %v369 = vadd.f32 0.0, %v368
    %370 = vdwg.mxu0
    %v371 = vadd.f32 %v259, %v361
    %v372 = vadd.f32 %v260, %v363
    %v373 = vadd.f32 %v261, %v367
    %v374 = vadd.f32 %v262, %v369
    %375 = vrot.lane.b32.xlu0 %v24, 1
    %v376 = vpop.permute.xlu0 %375
    %377 = vrot.lane.b32.xlu0 %v25, 1
    %v378 = vpop.permute.xlu0 %377
    %vm379 = vcmp.lt.s32.totalorder %v43, 1
    %v380 = vsel %vm379, %v376, %v378
    %v381 = vsel %vm379, %v378, %v376
    %s382 = scalar_lea.vmem %s1, 3
    %v383 = vld [vmem:[%s382] ss:$8 sm:$0x3]
    %v385 = vlaneseq
    %v386 = vshrl.u32 %v385, 7
    %v387 = vsub.s32 0, %v386
    %v388 = vrot.slane %v383, %v387
    %v389 = vlaneseq
    %v390 = vshrl.u32 %v389, 7
    %v391 = vsub.s32 1, %v390
    %v392 = vrot.slane %v383, %v391
    %v395 = vmul.f32 %v381, %v388
    %v396 = vmul.f32 %v380, %v392
    %s397 = scalar_lea.vmem %s2, 48
    %v398 = vld [vmem:[%s397] sm:$0xff]
    %v399 = vld [vmem:[%s397 + $0x8] sm:$0xff]
    %v401 = vsel %vm63, %v398, 0
    %v404 = vsel %vm63, %v399, 0
    %406 = vmatprep.subr.mxu0 0.0
    %407 = vmatpush1.msra.mxu0 0.0
    %408 = vmatprep.subr.mxu0 0.0
    %409 = vmatpush1.msra.mxu0 0.0
    %410 = vmatprep.subr.mxu0 0.0
    %411 = vmatpush1.msra.mxu0 0.0
    %412 = vmatprep.subr.mxu0 0.0
    %413 = vmatpush1.msra.mxu0 0.0
    %414 = vmatprep.subr.mxu0 0.0
    %415 = vmatpush1.msra.mxu0 0.0
    %416 = vmatprep.subr.mxu0 0.0
    %417 = vmatpush1.msra.mxu0 0.0
    %418 = vmatprep.subr.mxu0 0.0
    %419 = vmatpush1.msra.mxu0 0.0
    %420 = vmatprep.subr.mxu0 0.0
    %421 = vmatpush1.msra.mxu0 0.0
    %422 = vmatprep.subr.mxu0 0.0
    %423 = vmatpush1.msra.mxu0 0.0
    %424 = vmatprep.subr.mxu0 0.0
    %425 = vmatpush1.msra.mxu0 0.0
    %426 = vmatprep.subr.mxu0 0.0
    %427 = vmatpush1.msra.mxu0 0.0
    %428 = vmatprep.subr.mxu0 0.0
    %429 = vmatpush1.msra.mxu0 0.0
    %430 = vmatprep.subr.mxu0 0.0
    %431 = vmatpush1.msra.mxu0 0.0
    %432 = vmatprep.subr.mxu0 0.0
    %433 = vmatpush1.msra.mxu0 0.0
    %434 = vmatprep.subr.mxu0 0.0
    %435 = vmatpush1.msra.mxu0 0.0
    %436 = vmatprep.subr.mxu0 %v396
    %437 = vmatpush1.msra.mxu0 %v395
    %438 = vmatprep.subr.mxu0 0.0
    %439 = vmatpush2.msra.mxu0 0.0
    %440 = vmatprep.subr.mxu0 0.0
    %441 = vmatpush2.msra.mxu0 0.0
    %442 = vmatprep.subr.mxu0 0.0
    %443 = vmatpush2.msra.mxu0 0.0
    %444 = vmatprep.subr.mxu0 0.0
    %445 = vmatpush2.msra.mxu0 0.0
    %446 = vmatprep.subr.mxu0 0.0
    %447 = vmatpush2.msra.mxu0 0.0
    %448 = vmatprep.subr.mxu0 0.0
    %449 = vmatpush2.msra.mxu0 0.0
    %450 = vmatprep.subr.mxu0 0.0
    %451 = vmatpush2.msra.mxu0 0.0
    %452 = vmatprep.subr.mxu0 0.0
    %453 = vmatpush2.msra.mxu0 0.0
    %454 = vmatprep.subr.mxu0 0.0
    %455 = vmatpush2.msra.mxu0 0.0
    %456 = vmatprep.subr.mxu0 0.0
    %457 = vmatpush2.msra.mxu0 0.0
    %458 = vmatprep.subr.mxu0 0.0
    %459 = vmatpush2.msra.mxu0 0.0
    %460 = vmatprep.subr.mxu0 0.0
    %461 = vmatpush2.msra.mxu0 0.0
    %462 = vmatprep.subr.mxu0 0.0
    %463 = vmatpush2.msra.mxu0 0.0
    %464 = vmatprep.subr.mxu0 0.0
    %465 = vmatpush2.msra.mxu0 0.0
    %466 = vmatprep.subr.mxu0 0.0
    %467 = vmatpush2.msra.mxu0 0.0
    %468 = vmatprep.subr.mxu0 0.0
    %469 = vmatpush2.msra.mxu0 0.0
    %470 = vmatprep.mubr.f32.mxu0 0.0
    %471 = vmatmul.mubr.f32.gmra.mxu0 %v401
    %v472 = vpop.f32.mrf.mxu0
    %v473 = vadd.f32 0.0, %v472
    %v474 = vpop.f32.mrf.mxu0
    %v475 = vadd.f32 0.0, %v474
    %476 = vmatprep.mubr.f32.mxu0 0.0
    %477 = vmatmul.mubr.f32.gmra.mxu0 %v404
    %v478 = vpop.f32.mrf.mxu0
    %v479 = vadd.f32 0.0, %v478
    %v480 = vpop.f32.mrf.mxu0
    %v481 = vadd.f32 0.0, %v480
    %482 = vdwg.mxu0
    %v483 = vadd.f32 %v371, %v473
    %v484 = vadd.f32 %v372, %v475
    %v485 = vadd.f32 %v373, %v479
    %v486 = vadd.f32 %v374, %v481
    %s487 = scalar_lea.vmem %s2, 64
    %v488 = vld [vmem:[%s487] sm:$0xff]
    %v489 = vld [vmem:[%s487 + $0x8] sm:$0xff]
    %v491 = vsel %vm63, %v488, 0
    %v494 = vsel %vm63, %v489, 0
    %496 = vmatprep.subr.mxu0 0.0
    %497 = vmatpush1.msra.mxu0 0.0
    %498 = vmatprep.subr.mxu0 0.0
    %499 = vmatpush1.msra.mxu0 0.0
    %500 = vmatprep.subr.mxu0 0.0
    %501 = vmatpush1.msra.mxu0 0.0
    %502 = vmatprep.subr.mxu0 0.0
    %503 = vmatpush1.msra.mxu0 0.0
    %504 = vmatprep.subr.mxu0 0.0
    %505 = vmatpush1.msra.mxu0 0.0
    %506 = vmatprep.subr.mxu0 0.0
    %507 = vmatpush1.msra.mxu0 0.0
    %508 = vmatprep.subr.mxu0 0.0
    %509 = vmatpush1.msra.mxu0 0.0
    %510 = vmatprep.subr.mxu0 0.0
    %511 = vmatpush1.msra.mxu0 0.0
    %512 = vmatprep.subr.mxu0 0.0
    %513 = vmatpush1.msra.mxu0 0.0
    %514 = vmatprep.subr.mxu0 0.0
    %515 = vmatpush1.msra.mxu0 0.0
    %516 = vmatprep.subr.mxu0 0.0
    %517 = vmatpush1.msra.mxu0 0.0
    %518 = vmatprep.subr.mxu0 0.0
    %519 = vmatpush1.msra.mxu0 0.0
    %520 = vmatprep.subr.mxu0 0.0
    %521 = vmatpush1.msra.mxu0 0.0
    %522 = vmatprep.subr.mxu0 0.0
    %523 = vmatpush1.msra.mxu0 0.0
    %524 = vmatprep.subr.mxu0 0.0
    %525 = vmatpush1.msra.mxu0 0.0
    %526 = vmatprep.subr.mxu0 %v25
    %527 = vmatpush1.msra.mxu0 %v24
    %528 = vmatprep.subr.mxu0 0.0
    %529 = vmatpush2.msra.mxu0 0.0
    %530 = vmatprep.subr.mxu0 0.0
    %531 = vmatpush2.msra.mxu0 0.0
    %532 = vmatprep.subr.mxu0 0.0
    %533 = vmatpush2.msra.mxu0 0.0
    %534 = vmatprep.subr.mxu0 0.0
    %535 = vmatpush2.msra.mxu0 0.0
    %536 = vmatprep.subr.mxu0 0.0
    %537 = vmatpush2.msra.mxu0 0.0
    %538 = vmatprep.subr.mxu0 0.0
    %539 = vmatpush2.msra.mxu0 0.0
    %540 = vmatprep.subr.mxu0 0.0
    %541 = vmatpush2.msra.mxu0 0.0
    %542 = vmatprep.subr.mxu0 0.0
    %543 = vmatpush2.msra.mxu0 0.0
    %544 = vmatprep.subr.mxu0 0.0
    %545 = vmatpush2.msra.mxu0 0.0
    %546 = vmatprep.subr.mxu0 0.0
    %547 = vmatpush2.msra.mxu0 0.0
    %548 = vmatprep.subr.mxu0 0.0
    %549 = vmatpush2.msra.mxu0 0.0
    %550 = vmatprep.subr.mxu0 0.0
    %551 = vmatpush2.msra.mxu0 0.0
    %552 = vmatprep.subr.mxu0 0.0
    %553 = vmatpush2.msra.mxu0 0.0
    %554 = vmatprep.subr.mxu0 0.0
    %555 = vmatpush2.msra.mxu0 0.0
    %556 = vmatprep.subr.mxu0 0.0
    %557 = vmatpush2.msra.mxu0 0.0
    %558 = vmatprep.subr.mxu0 0.0
    %559 = vmatpush2.msra.mxu0 0.0
    %560 = vmatprep.mubr.f32.mxu0 0.0
    %561 = vmatmul.mubr.f32.gmra.mxu0 %v491
    %v562 = vpop.f32.mrf.mxu0
    %v563 = vadd.f32 0.0, %v562
    %v564 = vpop.f32.mrf.mxu0
    %v565 = vadd.f32 0.0, %v564
    %566 = vmatprep.mubr.f32.mxu0 0.0
    %567 = vmatmul.mubr.f32.gmra.mxu0 %v494
    %v568 = vpop.f32.mrf.mxu0
    %v569 = vadd.f32 0.0, %v568
    %v570 = vpop.f32.mrf.mxu0
    %v571 = vadd.f32 0.0, %v570
    %572 = vdwg.mxu0
    %v573 = vadd.f32 %v483, %v563
    %v574 = vadd.f32 %v484, %v565
    %v575 = vadd.f32 %v485, %v569
    %v576 = vadd.f32 %v486, %v571
    %577 = vrot.lane.b32.xlu0 %v24, 127
    %v578 = vpop.permute.xlu0 %577
    %579 = vrot.lane.b32.xlu0 %v25, 127
    %v580 = vpop.permute.xlu0 %579
    %vm581 = vcmp.lt.s32.totalorder %v43, 127
    %v582 = vsel %vm581, %v578, %v580
    %v583 = vsel %vm581, %v580, %v578
    %s584 = scalar_lea.vmem %s1, 5
    %v585 = vld [vmem:[%s584] ss:$8 sm:$0x3]
    %v587 = vlaneseq
    %v588 = vshrl.u32 %v587, 7
    %v589 = vsub.s32 0, %v588
    %v590 = vrot.slane %v585, %v589
    %v591 = vlaneseq
    %v592 = vshrl.u32 %v591, 7
    %v593 = vsub.s32 1, %v592
    %v594 = vrot.slane %v585, %v593
    %v597 = vmul.f32 %v582, %v590
    %v598 = vmul.f32 %v583, %v594
    %s599 = scalar_lea.vmem %s2, 80
    %v600 = vld [vmem:[%s599] sm:$0xff]
    %v601 = vld [vmem:[%s599 + $0x8] sm:$0xff]
    %v603 = vsel %vm63, %v600, 0
    %v606 = vsel %vm63, %v601, 0
    %608 = vmatprep.subr.mxu0 0.0
    %609 = vmatpush1.msra.mxu0 0.0
    %610 = vmatprep.subr.mxu0 0.0
    %611 = vmatpush1.msra.mxu0 0.0
    %612 = vmatprep.subr.mxu0 0.0
    %613 = vmatpush1.msra.mxu0 0.0
    %614 = vmatprep.subr.mxu0 0.0
    %615 = vmatpush1.msra.mxu0 0.0
    %616 = vmatprep.subr.mxu0 0.0
    %617 = vmatpush1.msra.mxu0 0.0
    %618 = vmatprep.subr.mxu0 0.0
    %619 = vmatpush1.msra.mxu0 0.0
    %620 = vmatprep.subr.mxu0 0.0
    %621 = vmatpush1.msra.mxu0 0.0
    %622 = vmatprep.subr.mxu0 0.0
    %623 = vmatpush1.msra.mxu0 0.0
    %624 = vmatprep.subr.mxu0 0.0
    %625 = vmatpush1.msra.mxu0 0.0
    %626 = vmatprep.subr.mxu0 0.0
    %627 = vmatpush1.msra.mxu0 0.0
    %628 = vmatprep.subr.mxu0 0.0
    %629 = vmatpush1.msra.mxu0 0.0
    %630 = vmatprep.subr.mxu0 0.0
    %631 = vmatpush1.msra.mxu0 0.0
    %632 = vmatprep.subr.mxu0 0.0
    %633 = vmatpush1.msra.mxu0 0.0
    %634 = vmatprep.subr.mxu0 0.0
    %635 = vmatpush1.msra.mxu0 0.0
    %636 = vmatprep.subr.mxu0 0.0
    %637 = vmatpush1.msra.mxu0 0.0
    %638 = vmatprep.subr.mxu0 %v598
    %639 = vmatpush1.msra.mxu0 %v597
    %640 = vmatprep.subr.mxu0 0.0
    %641 = vmatpush2.msra.mxu0 0.0
    %642 = vmatprep.subr.mxu0 0.0
    %643 = vmatpush2.msra.mxu0 0.0
    %644 = vmatprep.subr.mxu0 0.0
    %645 = vmatpush2.msra.mxu0 0.0
    %646 = vmatprep.subr.mxu0 0.0
    %647 = vmatpush2.msra.mxu0 0.0
    %648 = vmatprep.subr.mxu0 0.0
    %649 = vmatpush2.msra.mxu0 0.0
    %650 = vmatprep.subr.mxu0 0.0
    %651 = vmatpush2.msra.mxu0 0.0
    %652 = vmatprep.subr.mxu0 0.0
    %653 = vmatpush2.msra.mxu0 0.0
    %654 = vmatprep.subr.mxu0 0.0
    %655 = vmatpush2.msra.mxu0 0.0
    %656 = vmatprep.subr.mxu0 0.0
    %657 = vmatpush2.msra.mxu0 0.0
    %658 = vmatprep.subr.mxu0 0.0
    %659 = vmatpush2.msra.mxu0 0.0
    %660 = vmatprep.subr.mxu0 0.0
    %661 = vmatpush2.msra.mxu0 0.0
    %662 = vmatprep.subr.mxu0 0.0
    %663 = vmatpush2.msra.mxu0 0.0
    %664 = vmatprep.subr.mxu0 0.0
    %665 = vmatpush2.msra.mxu0 0.0
    %666 = vmatprep.subr.mxu0 0.0
    %667 = vmatpush2.msra.mxu0 0.0
    %668 = vmatprep.subr.mxu0 0.0
    %669 = vmatpush2.msra.mxu0 0.0
    %670 = vmatprep.subr.mxu0 0.0
    %671 = vmatpush2.msra.mxu0 0.0
    %672 = vmatprep.mubr.f32.mxu0 0.0
    %673 = vmatmul.mubr.f32.gmra.mxu0 %v603
    %v674 = vpop.f32.mrf.mxu0
    %v675 = vadd.f32 0.0, %v674
    %v676 = vpop.f32.mrf.mxu0
    %v677 = vadd.f32 0.0, %v676
    %678 = vmatprep.mubr.f32.mxu0 0.0
    %679 = vmatmul.mubr.f32.gmra.mxu0 %v606
    %v680 = vpop.f32.mrf.mxu0
    %v681 = vadd.f32 0.0, %v680
    %v682 = vpop.f32.mrf.mxu0
    %v683 = vadd.f32 0.0, %v682
    %684 = vdwg.mxu0
    %v685 = vadd.f32 %v573, %v675
    %v686 = vadd.f32 %v574, %v677
    %v687 = vadd.f32 %v575, %v681
    %v688 = vadd.f32 %v576, %v683
    %689 = vrot.lane.b32.xlu0 %v24, 113
    %v690 = vpop.permute.xlu0 %689
    %691 = vrot.lane.b32.xlu0 %v25, 113
    %v692 = vpop.permute.xlu0 %691
    %vm693 = vcmp.lt.s32.totalorder %v43, 113
    %v694 = vsel %vm693, %v690, %v692
    %v695 = vsel %vm693, %v692, %v690
    %s696 = scalar_lea.vmem %s1, 6
    %v697 = vld [vmem:[%s696] ss:$8 sm:$0x3]
    %v699 = vlaneseq
    %v700 = vshrl.u32 %v699, 7
    %v701 = vsub.s32 0, %v700
    %v702 = vrot.slane %v697, %v701
    %v703 = vlaneseq
    %v704 = vshrl.u32 %v703, 7
    %v705 = vsub.s32 1, %v704
    %v706 = vrot.slane %v697, %v705
    %v709 = vmul.f32 %v694, %v702
    %v710 = vmul.f32 %v695, %v706
    %s711 = scalar_lea.vmem %s2, 96
    %v712 = vld [vmem:[%s711] sm:$0xff]
    %v713 = vld [vmem:[%s711 + $0x8] sm:$0xff]
    %v715 = vsel %vm63, %v712, 0
    %v718 = vsel %vm63, %v713, 0
    %720 = vmatprep.subr.mxu0 0.0
    %721 = vmatpush1.msra.mxu0 0.0
    %722 = vmatprep.subr.mxu0 0.0
    %723 = vmatpush1.msra.mxu0 0.0
    %724 = vmatprep.subr.mxu0 0.0
    %725 = vmatpush1.msra.mxu0 0.0
    %726 = vmatprep.subr.mxu0 0.0
    %727 = vmatpush1.msra.mxu0 0.0
    %728 = vmatprep.subr.mxu0 0.0
    %729 = vmatpush1.msra.mxu0 0.0
    %730 = vmatprep.subr.mxu0 0.0
    %731 = vmatpush1.msra.mxu0 0.0
    %732 = vmatprep.subr.mxu0 0.0
    %733 = vmatpush1.msra.mxu0 0.0
    %734 = vmatprep.subr.mxu0 0.0
    %735 = vmatpush1.msra.mxu0 0.0
    %736 = vmatprep.subr.mxu0 0.0
    %737 = vmatpush1.msra.mxu0 0.0
    %738 = vmatprep.subr.mxu0 0.0
    %739 = vmatpush1.msra.mxu0 0.0
    %740 = vmatprep.subr.mxu0 0.0
    %741 = vmatpush1.msra.mxu0 0.0
    %742 = vmatprep.subr.mxu0 0.0
    %743 = vmatpush1.msra.mxu0 0.0
    %744 = vmatprep.subr.mxu0 0.0
    %745 = vmatpush1.msra.mxu0 0.0
    %746 = vmatprep.subr.mxu0 0.0
    %747 = vmatpush1.msra.mxu0 0.0
    %748 = vmatprep.subr.mxu0 0.0
    %749 = vmatpush1.msra.mxu0 0.0
    %750 = vmatprep.subr.mxu0 %v710
    %751 = vmatpush1.msra.mxu0 %v709
    %752 = vmatprep.subr.mxu0 0.0
    %753 = vmatpush2.msra.mxu0 0.0
    %754 = vmatprep.subr.mxu0 0.0
    %755 = vmatpush2.msra.mxu0 0.0
    %756 = vmatprep.subr.mxu0 0.0
    %757 = vmatpush2.msra.mxu0 0.0
    %758 = vmatprep.subr.mxu0 0.0
    %759 = vmatpush2.msra.mxu0 0.0
    %760 = vmatprep.subr.mxu0 0.0
    %761 = vmatpush2.msra.mxu0 0.0
    %762 = vmatprep.subr.mxu0 0.0
    %763 = vmatpush2.msra.mxu0 0.0
    %764 = vmatprep.subr.mxu0 0.0
    %765 = vmatpush2.msra.mxu0 0.0
    %766 = vmatprep.subr.mxu0 0.0
    %767 = vmatpush2.msra.mxu0 0.0
    %768 = vmatprep.subr.mxu0 0.0
    %769 = vmatpush2.msra.mxu0 0.0
    %770 = vmatprep.subr.mxu0 0.0
    %771 = vmatpush2.msra.mxu0 0.0
    %772 = vmatprep.subr.mxu0 0.0
    %773 = vmatpush2.msra.mxu0 0.0
    %774 = vmatprep.subr.mxu0 0.0
    %775 = vmatpush2.msra.mxu0 0.0
    %776 = vmatprep.subr.mxu0 0.0
    %777 = vmatpush2.msra.mxu0 0.0
    %778 = vmatprep.subr.mxu0 0.0
    %779 = vmatpush2.msra.mxu0 0.0
    %780 = vmatprep.subr.mxu0 0.0
    %781 = vmatpush2.msra.mxu0 0.0
    %782 = vmatprep.subr.mxu0 0.0
    %783 = vmatpush2.msra.mxu0 0.0
    %784 = vmatprep.mubr.f32.mxu0 0.0
    %785 = vmatmul.mubr.f32.gmra.mxu0 %v715
    %v786 = vpop.f32.mrf.mxu0
    %v787 = vadd.f32 0.0, %v786
    %v788 = vpop.f32.mrf.mxu0
    %v789 = vadd.f32 0.0, %v788
    %790 = vmatprep.mubr.f32.mxu0 0.0
    %791 = vmatmul.mubr.f32.gmra.mxu0 %v718
    %v792 = vpop.f32.mrf.mxu0
    %v793 = vadd.f32 0.0, %v792
    %v794 = vpop.f32.mrf.mxu0
    %v795 = vadd.f32 0.0, %v794
    %796 = vdwg.mxu0
    %v797 = vadd.f32 %v685, %v787
    %v798 = vadd.f32 %v686, %v789
    %v799 = vadd.f32 %v687, %v793
    %v800 = vadd.f32 %v688, %v795
    %801 = vrot.lane.b32.xlu0 %v24, 112
    %v802 = vpop.permute.xlu0 %801
    %803 = vrot.lane.b32.xlu0 %v25, 112
    %v804 = vpop.permute.xlu0 %803
    %vm805 = vcmp.lt.s32.totalorder %v43, 112
    %v806 = vsel %vm805, %v802, %v804
    %v807 = vsel %vm805, %v804, %v802
    %s808 = scalar_lea.vmem %s1, 7
    %v809 = vld [vmem:[%s808] ss:$8 sm:$0x3]
    %v811 = vlaneseq
    %v812 = vshrl.u32 %v811, 7
    %v813 = vsub.s32 0, %v812
    %v814 = vrot.slane %v809, %v813
    %v815 = vlaneseq
    %v816 = vshrl.u32 %v815, 7
    %v817 = vsub.s32 1, %v816
    %v818 = vrot.slane %v809, %v817
    %v821 = vmul.f32 %v806, %v814
    %v822 = vmul.f32 %v807, %v818
    %s823 = scalar_lea.vmem %s2, 112
    %v824 = vld [vmem:[%s823] sm:$0xff]
    %v825 = vld [vmem:[%s823 + $0x8] sm:$0xff]
    %v827 = vsel %vm63, %v824, 0
    %v830 = vsel %vm63, %v825, 0
    %832 = vmatprep.subr.mxu0 0.0
    %833 = vmatpush1.msra.mxu0 0.0
    %834 = vmatprep.subr.mxu0 0.0
    %835 = vmatpush1.msra.mxu0 0.0
    %836 = vmatprep.subr.mxu0 0.0
    %837 = vmatpush1.msra.mxu0 0.0
    %838 = vmatprep.subr.mxu0 0.0
    %839 = vmatpush1.msra.mxu0 0.0
    %840 = vmatprep.subr.mxu0 0.0
    %841 = vmatpush1.msra.mxu0 0.0
    %842 = vmatprep.subr.mxu0 0.0
    %843 = vmatpush1.msra.mxu0 0.0
    %844 = vmatprep.subr.mxu0 0.0
    %845 = vmatpush1.msra.mxu0 0.0
    %846 = vmatprep.subr.mxu0 0.0
    %847 = vmatpush1.msra.mxu0 0.0
    %848 = vmatprep.subr.mxu0 0.0
    %849 = vmatpush1.msra.mxu0 0.0
    %850 = vmatprep.subr.mxu0 0.0
    %851 = vmatpush1.msra.mxu0 0.0
    %852 = vmatprep.subr.mxu0 0.0
    %853 = vmatpush1.msra.mxu0 0.0
    %854 = vmatprep.subr.mxu0 0.0
    %855 = vmatpush1.msra.mxu0 0.0
    %856 = vmatprep.subr.mxu0 0.0
    %857 = vmatpush1.msra.mxu0 0.0
    %858 = vmatprep.subr.mxu0 0.0
    %859 = vmatpush1.msra.mxu0 0.0
    %860 = vmatprep.subr.mxu0 0.0
    %861 = vmatpush1.msra.mxu0 0.0
    %862 = vmatprep.subr.mxu0 %v822
    %863 = vmatpush1.msra.mxu0 %v821
    %864 = vmatprep.subr.mxu0 0.0
    %865 = vmatpush2.msra.mxu0 0.0
    %866 = vmatprep.subr.mxu0 0.0
    %867 = vmatpush2.msra.mxu0 0.0
    %868 = vmatprep.subr.mxu0 0.0
    %869 = vmatpush2.msra.mxu0 0.0
    %870 = vmatprep.subr.mxu0 0.0
    %871 = vmatpush2.msra.mxu0 0.0
    %872 = vmatprep.subr.mxu0 0.0
    %873 = vmatpush2.msra.mxu0 0.0
    %874 = vmatprep.subr.mxu0 0.0
    %875 = vmatpush2.msra.mxu0 0.0
    %876 = vmatprep.subr.mxu0 0.0
    %877 = vmatpush2.msra.mxu0 0.0
    %878 = vmatprep.subr.mxu0 0.0
    %879 = vmatpush2.msra.mxu0 0.0
    %880 = vmatprep.subr.mxu0 0.0
    %881 = vmatpush2.msra.mxu0 0.0
    %882 = vmatprep.subr.mxu0 0.0
    %883 = vmatpush2.msra.mxu0 0.0
    %884 = vmatprep.subr.mxu0 0.0
    %885 = vmatpush2.msra.mxu0 0.0
    %886 = vmatprep.subr.mxu0 0.0
    %887 = vmatpush2.msra.mxu0 0.0
    %888 = vmatprep.subr.mxu0 0.0
    %889 = vmatpush2.msra.mxu0 0.0
    %890 = vmatprep.subr.mxu0 0.0
    %891 = vmatpush2.msra.mxu0 0.0
    %892 = vmatprep.subr.mxu0 0.0
    %893 = vmatpush2.msra.mxu0 0.0
    %894 = vmatprep.subr.mxu0 0.0
    %895 = vmatpush2.msra.mxu0 0.0
    %896 = vmatprep.mubr.f32.mxu0 0.0
    %897 = vmatmul.mubr.f32.gmra.mxu0 %v827
    %v898 = vpop.f32.mrf.mxu0
    %v899 = vadd.f32 0.0, %v898
    %v900 = vpop.f32.mrf.mxu0
    %v901 = vadd.f32 0.0, %v900
    %902 = vmatprep.mubr.f32.mxu0 0.0
    %903 = vmatmul.mubr.f32.gmra.mxu0 %v830
    %v904 = vpop.f32.mrf.mxu0
    %v905 = vadd.f32 0.0, %v904
    %v906 = vpop.f32.mrf.mxu0
    %v907 = vadd.f32 0.0, %v906
    %908 = vdwg.mxu0
    %v909 = vadd.f32 %v797, %v899
    %v910 = vadd.f32 %v798, %v901
    %v911 = vadd.f32 %v799, %v905
    %v912 = vadd.f32 %v800, %v907
    %913 = vrot.lane.b32.xlu0 %v24, 111
    %v914 = vpop.permute.xlu0 %913
    %915 = vrot.lane.b32.xlu0 %v25, 111
    %v916 = vpop.permute.xlu0 %915
    %vm917 = vcmp.lt.s32.totalorder %v43, 111
    %v918 = vsel %vm917, %v914, %v916
    %v919 = vsel %vm917, %v916, %v914
    %s920 = scalar_lea.vmem %s1, 16
    %v921 = vld [vmem:[%s920] ss:$8 sm:$0x3]
    %v923 = vlaneseq
    %v924 = vshrl.u32 %v923, 7
    %v925 = vsub.s32 0, %v924
    %v926 = vrot.slane %v921, %v925
    %v927 = vlaneseq
    %v928 = vshrl.u32 %v927, 7
    %v929 = vsub.s32 1, %v928
    %v930 = vrot.slane %v921, %v929
    %v933 = vmul.f32 %v918, %v926
    %v934 = vmul.f32 %v919, %v930
    %s935 = scalar_lea.vmem %s2, 128
    %v936 = vld [vmem:[%s935] sm:$0xff]
    %v937 = vld [vmem:[%s935 + $0x8] sm:$0xff]
    %v939 = vsel %vm63, %v936, 0
    %v942 = vsel %vm63, %v937, 0
    %944 = vmatprep.subr.mxu0 0.0
    %945 = vmatpush1.msra.mxu0 0.0
    %946 = vmatprep.subr.mxu0 0.0
    %947 = vmatpush1.msra.mxu0 0.0
    %948 = vmatprep.subr.mxu0 0.0
    %949 = vmatpush1.msra.mxu0 0.0
    %950 = vmatprep.subr.mxu0 0.0
    %951 = vmatpush1.msra.mxu0 0.0
    %952 = vmatprep.subr.mxu0 0.0
    %953 = vmatpush1.msra.mxu0 0.0
    %954 = vmatprep.subr.mxu0 0.0
    %955 = vmatpush1.msra.mxu0 0.0
    %956 = vmatprep.subr.mxu0 0.0
    %957 = vmatpush1.msra.mxu0 0.0
    %958 = vmatprep.subr.mxu0 0.0
    %959 = vmatpush1.msra.mxu0 0.0
    %960 = vmatprep.subr.mxu0 0.0
    %961 = vmatpush1.msra.mxu0 0.0
    %962 = vmatprep.subr.mxu0 0.0
    %963 = vmatpush1.msra.mxu0 0.0
    %964 = vmatprep.subr.mxu0 0.0
    %965 = vmatpush1.msra.mxu0 0.0
    %966 = vmatprep.subr.mxu0 0.0
    %967 = vmatpush1.msra.mxu0 0.0
    %968 = vmatprep.subr.mxu0 0.0
    %969 = vmatpush1.msra.mxu0 0.0
    %970 = vmatprep.subr.mxu0 0.0
    %971 = vmatpush1.msra.mxu0 0.0
    %972 = vmatprep.subr.mxu0 0.0
    %973 = vmatpush1.msra.mxu0 0.0
    %974 = vmatprep.subr.mxu0 %v934
    %975 = vmatpush1.msra.mxu0 %v933
    %976 = vmatprep.subr.mxu0 0.0
    %977 = vmatpush2.msra.mxu0 0.0
    %978 = vmatprep.subr.mxu0 0.0
    %979 = vmatpush2.msra.mxu0 0.0
    %980 = vmatprep.subr.mxu0 0.0
    %981 = vmatpush2.msra.mxu0 0.0
    %982 = vmatprep.subr.mxu0 0.0
    %983 = vmatpush2.msra.mxu0 0.0
    %984 = vmatprep.subr.mxu0 0.0
    %985 = vmatpush2.msra.mxu0 0.0
    %986 = vmatprep.subr.mxu0 0.0
    %987 = vmatpush2.msra.mxu0 0.0
    %988 = vmatprep.subr.mxu0 0.0
    %989 = vmatpush2.msra.mxu0 0.0
    %990 = vmatprep.subr.mxu0 0.0
    %991 = vmatpush2.msra.mxu0 0.0
    %992 = vmatprep.subr.mxu0 0.0
    %993 = vmatpush2.msra.mxu0 0.0
    %994 = vmatprep.subr.mxu0 0.0
    %995 = vmatpush2.msra.mxu0 0.0
    %996 = vmatprep.subr.mxu0 0.0
    %997 = vmatpush2.msra.mxu0 0.0
    %998 = vmatprep.subr.mxu0 0.0
    %999 = vmatpush2.msra.mxu0 0.0
    %1000 = vmatprep.subr.mxu0 0.0
    %1001 = vmatpush2.msra.mxu0 0.0
    %1002 = vmatprep.subr.mxu0 0.0
    %1003 = vmatpush2.msra.mxu0 0.0
    %1004 = vmatprep.subr.mxu0 0.0
    %1005 = vmatpush2.msra.mxu0 0.0
    %1006 = vmatprep.subr.mxu0 0.0
    %1007 = vmatpush2.msra.mxu0 0.0
    %1008 = vmatprep.mubr.f32.mxu0 0.0
    %1009 = vmatmul.mubr.f32.gmra.mxu0 %v939
    %v1010 = vpop.f32.mrf.mxu0
    %v1011 = vadd.f32 0.0, %v1010
    %v1012 = vpop.f32.mrf.mxu0
    %v1013 = vadd.f32 0.0, %v1012
    %1014 = vmatprep.mubr.f32.mxu0 0.0
    %1015 = vmatmul.mubr.f32.gmra.mxu0 %v942
    %v1016 = vpop.f32.mrf.mxu0
    %v1017 = vadd.f32 0.0, %v1016
    %v1018 = vpop.f32.mrf.mxu0
    %v1019 = vadd.f32 0.0, %v1018
    %1020 = vdwg.mxu0
    %v1021 = vadd.f32 %v909, %v1011
    %v1022 = vadd.f32 %v910, %v1013
    %v1023 = vadd.f32 %v911, %v1017
    %v1024 = vadd.f32 %v912, %v1019
    %v1025 = vmax.f32 %v1021, 0.0
    %v1026 = vmax.f32 %v1022, 0.0
    %v1027 = vmax.f32 %v1023, 0.0
    %v1028 = vmax.f32 %v1024, 0.0
    %1029 = vset.pattern.permute.xlu0 1
    %1030 = vperm.xlu0 %1029, %v26
    %v1031 = vpop.permute.xlu0 %1030
    %1033 = vset.pattern.permute.xlu0 1
    %1034 = vperm.xlu0 %1033, %v27
    %v1035 = vpop.permute.xlu0 %1034
    %1037 = vrot.lane.b32.xlu0 %v1025, 17
    %v1038 = vpop.permute.xlu0 %1037
    %1039 = vrot.lane.b32.xlu0 %v1027, 17
    %v1040 = vpop.permute.xlu0 %1039
    %1041 = vrot.lane.b32.xlu0 %v1026, 17
    %v1042 = vpop.permute.xlu0 %1041
    %1043 = vrot.lane.b32.xlu0 %v1028, 17
    %v1044 = vpop.permute.xlu0 %1043
    %v1045 = vsel %vm44, %v1038, %v1042
    %v1046 = vsel %vm44, %v1040, %v1044
    %v1047 = vsel %vm44, %v1042, %v1038
    %v1048 = vsel %vm44, %v1044, %v1040
    %v1049 = vmul.f32 %v1047, %v52
    %v1050 = vmul.f32 %v1045, %v56
    %v1051 = vmul.f32 %v1048, %v52
    %v1052 = vmul.f32 %v1046, %v56
    %v1053 = vld [vmem:[%s3] sm:$0xff]
    %v1054 = vld [vmem:[%s3 + $0x8] sm:$0xff]
    %vm1055 = vcmask 130048
    %v1057 = vsel %vm1055, %v1053, 0
    %v1060 = vsel %vm1055, %v1054, 0
    %1062 = vmatprep.subr.mxu0 0.0
    %1063 = vmatpush1.msra.mxu0 0.0
    %1064 = vmatprep.subr.mxu0 0.0
    %1065 = vmatpush1.msra.mxu0 0.0
    %1066 = vmatprep.subr.mxu0 0.0
    %1067 = vmatpush1.msra.mxu0 0.0
    %1068 = vmatprep.subr.mxu0 0.0
    %1069 = vmatpush1.msra.mxu0 0.0
    %1070 = vmatprep.subr.mxu0 0.0
    %1071 = vmatpush1.msra.mxu0 0.0
    %1072 = vmatprep.subr.mxu0 0.0
    %1073 = vmatpush1.msra.mxu0 0.0
    %1074 = vmatprep.subr.mxu0 0.0
    %1075 = vmatpush1.msra.mxu0 0.0
    %1076 = vmatprep.subr.mxu0 0.0
    %1077 = vmatpush1.msra.mxu0 0.0
    %1078 = vmatprep.subr.mxu0 0.0
    %1079 = vmatpush1.msra.mxu0 0.0
    %1080 = vmatprep.subr.mxu0 0.0
    %1081 = vmatpush1.msra.mxu0 0.0
    %1082 = vmatprep.subr.mxu0 0.0
    %1083 = vmatpush1.msra.mxu0 0.0
    %1084 = vmatprep.subr.mxu0 0.0
    %1085 = vmatpush1.msra.mxu0 0.0
    %1086 = vmatprep.subr.mxu0 0.0
    %1087 = vmatpush1.msra.mxu0 0.0
    %1088 = vmatprep.subr.mxu0 0.0
    %1089 = vmatpush1.msra.mxu0 0.0
    %1090 = vmatprep.subr.mxu0 %v1052
    %1091 = vmatpush1.msra.mxu0 %v1051
    %1092 = vmatprep.subr.mxu0 %v1050
    %1093 = vmatpush1.msra.mxu0 %v1049
    %1094 = vmatprep.subr.mxu0 0.0
    %1095 = vmatpush2.msra.mxu0 0.0
    %1096 = vmatprep.subr.mxu0 0.0
    %1097 = vmatpush2.msra.mxu0 0.0
    %1098 = vmatprep.subr.mxu0 0.0
    %1099 = vmatpush2.msra.mxu0 0.0
    %1100 = vmatprep.subr.mxu0 0.0
    %1101 = vmatpush2.msra.mxu0 0.0
    %1102 = vmatprep.subr.mxu0 0.0
    %1103 = vmatpush2.msra.mxu0 0.0
    %1104 = vmatprep.subr.mxu0 0.0
    %1105 = vmatpush2.msra.mxu0 0.0
    %1106 = vmatprep.subr.mxu0 0.0
    %1107 = vmatpush2.msra.mxu0 0.0
    %1108 = vmatprep.subr.mxu0 0.0
    %1109 = vmatpush2.msra.mxu0 0.0
    %1110 = vmatprep.subr.mxu0 0.0
    %1111 = vmatpush2.msra.mxu0 0.0
    %1112 = vmatprep.subr.mxu0 0.0
    %1113 = vmatpush2.msra.mxu0 0.0
    %1114 = vmatprep.subr.mxu0 0.0
    %1115 = vmatpush2.msra.mxu0 0.0
    %1116 = vmatprep.subr.mxu0 0.0
    %1117 = vmatpush2.msra.mxu0 0.0
    %1118 = vmatprep.subr.mxu0 0.0
    %1119 = vmatpush2.msra.mxu0 0.0
    %1120 = vmatprep.subr.mxu0 0.0
    %1121 = vmatpush2.msra.mxu0 0.0
    %1122 = vmatprep.subr.mxu0 0.0
    %1123 = vmatpush2.msra.mxu0 0.0
    %1124 = vmatprep.subr.mxu0 0.0
    %1125 = vmatpush2.msra.mxu0 0.0
    %1126 = vmatprep.mubr.f32.mxu0 0.0
    %1127 = vmatmul.mubr.f32.gmra.mxu0 %v1057
    %v1128 = vpop.f32.mrf.mxu0
    %v1129 = vadd.f32 0.0, %v1128
    %v1130 = vpop.f32.mrf.mxu0
    %v1131 = vadd.f32 0.0, %v1130
    %1132 = vmatprep.mubr.f32.mxu0 0.0
    %1133 = vmatmul.mubr.f32.gmra.mxu0 %v1060
    %v1134 = vpop.f32.mrf.mxu0
    %v1135 = vadd.f32 0.0, %v1134
    %v1136 = vpop.f32.mrf.mxu0
    %v1137 = vadd.f32 0.0, %v1136
    %1138 = vdwg.mxu0
    %v1139 = vadd.f32 %v1031, %v1129
    %v1140 = vadd.f32 %v1031, %v1131
    %v1141 = vadd.f32 %v1035, %v1135
    %v1142 = vadd.f32 %v1035, %v1137
    %1143 = vrot.lane.b32.xlu0 %v1025, 16
    %v1144 = vpop.permute.xlu0 %1143
    %1145 = vrot.lane.b32.xlu0 %v1027, 16
    %v1146 = vpop.permute.xlu0 %1145
    %1147 = vrot.lane.b32.xlu0 %v1026, 16
    %v1148 = vpop.permute.xlu0 %1147
    %1149 = vrot.lane.b32.xlu0 %v1028, 16
    %v1150 = vpop.permute.xlu0 %1149
    %v1151 = vsel %vm155, %v1144, %v1148
    %v1152 = vsel %vm155, %v1146, %v1150
    %v1153 = vsel %vm155, %v1148, %v1144
    %v1154 = vsel %vm155, %v1150, %v1146
    %v1155 = vmul.f32 %v1153, %v164
    %v1156 = vmul.f32 %v1151, %v168
    %v1157 = vmul.f32 %v1154, %v164
    %v1158 = vmul.f32 %v1152, %v168
    %s1159 = scalar_lea.vmem %s3, 16
    %v1160 = vld [vmem:[%s1159] sm:$0xff]
    %v1161 = vld [vmem:[%s1159 + $0x8] sm:$0xff]
    %v1163 = vsel %vm1055, %v1160, 0
    %v1166 = vsel %vm1055, %v1161, 0
    %1168 = vmatprep.subr.mxu0 0.0
    %1169 = vmatpush1.msra.mxu0 0.0
    %1170 = vmatprep.subr.mxu0 0.0
    %1171 = vmatpush1.msra.mxu0 0.0
    %1172 = vmatprep.subr.mxu0 0.0
    %1173 = vmatpush1.msra.mxu0 0.0
    %1174 = vmatprep.subr.mxu0 0.0
    %1175 = vmatpush1.msra.mxu0 0.0
    %1176 = vmatprep.subr.mxu0 0.0
    %1177 = vmatpush1.msra.mxu0 0.0
    %1178 = vmatprep.subr.mxu0 0.0
    %1179 = vmatpush1.msra.mxu0 0.0
    %1180 = vmatprep.subr.mxu0 0.0
    %1181 = vmatpush1.msra.mxu0 0.0
    %1182 = vmatprep.subr.mxu0 0.0
    %1183 = vmatpush1.msra.mxu0 0.0
    %1184 = vmatprep.subr.mxu0 0.0
    %1185 = vmatpush1.msra.mxu0 0.0
    %1186 = vmatprep.subr.mxu0 0.0
    %1187 = vmatpush1.msra.mxu0 0.0
    %1188 = vmatprep.subr.mxu0 0.0
    %1189 = vmatpush1.msra.mxu0 0.0
    %1190 = vmatprep.subr.mxu0 0.0
    %1191 = vmatpush1.msra.mxu0 0.0
    %1192 = vmatprep.subr.mxu0 0.0
    %1193 = vmatpush1.msra.mxu0 0.0
    %1194 = vmatprep.subr.mxu0 0.0
    %1195 = vmatpush1.msra.mxu0 0.0
    %1196 = vmatprep.subr.mxu0 %v1158
    %1197 = vmatpush1.msra.mxu0 %v1157
    %1198 = vmatprep.subr.mxu0 %v1156
    %1199 = vmatpush1.msra.mxu0 %v1155
    %1200 = vmatprep.subr.mxu0 0.0
    %1201 = vmatpush2.msra.mxu0 0.0
    %1202 = vmatprep.subr.mxu0 0.0
    %1203 = vmatpush2.msra.mxu0 0.0
    %1204 = vmatprep.subr.mxu0 0.0
    %1205 = vmatpush2.msra.mxu0 0.0
    %1206 = vmatprep.subr.mxu0 0.0
    %1207 = vmatpush2.msra.mxu0 0.0
    %1208 = vmatprep.subr.mxu0 0.0
    %1209 = vmatpush2.msra.mxu0 0.0
    %1210 = vmatprep.subr.mxu0 0.0
    %1211 = vmatpush2.msra.mxu0 0.0
    %1212 = vmatprep.subr.mxu0 0.0
    %1213 = vmatpush2.msra.mxu0 0.0
    %1214 = vmatprep.subr.mxu0 0.0
    %1215 = vmatpush2.msra.mxu0 0.0
    %1216 = vmatprep.subr.mxu0 0.0
    %1217 = vmatpush2.msra.mxu0 0.0
    %1218 = vmatprep.subr.mxu0 0.0
    %1219 = vmatpush2.msra.mxu0 0.0
    %1220 = vmatprep.subr.mxu0 0.0
    %1221 = vmatpush2.msra.mxu0 0.0
    %1222 = vmatprep.subr.mxu0 0.0
    %1223 = vmatpush2.msra.mxu0 0.0
    %1224 = vmatprep.subr.mxu0 0.0
    %1225 = vmatpush2.msra.mxu0 0.0
    %1226 = vmatprep.subr.mxu0 0.0
    %1227 = vmatpush2.msra.mxu0 0.0
    %1228 = vmatprep.subr.mxu0 0.0
    %1229 = vmatpush2.msra.mxu0 0.0
    %1230 = vmatprep.subr.mxu0 0.0
    %1231 = vmatpush2.msra.mxu0 0.0
    %1232 = vmatprep.mubr.f32.mxu0 0.0
    %1233 = vmatmul.mubr.f32.gmra.mxu0 %v1163
    %v1234 = vpop.f32.mrf.mxu0
    %v1235 = vadd.f32 0.0, %v1234
    %v1236 = vpop.f32.mrf.mxu0
    %v1237 = vadd.f32 0.0, %v1236
    %1238 = vmatprep.mubr.f32.mxu0 0.0
    %1239 = vmatmul.mubr.f32.gmra.mxu0 %v1166
    %v1240 = vpop.f32.mrf.mxu0
    %v1241 = vadd.f32 0.0, %v1240
    %v1242 = vpop.f32.mrf.mxu0
    %v1243 = vadd.f32 0.0, %v1242
    %1244 = vdwg.mxu0
    %v1245 = vadd.f32 %v1139, %v1235
    %v1246 = vadd.f32 %v1140, %v1237
    %v1247 = vadd.f32 %v1141, %v1241
    %v1248 = vadd.f32 %v1142, %v1243
    %1249 = vrot.lane.b32.xlu0 %v1025, 15
    %v1250 = vpop.permute.xlu0 %1249
    %1251 = vrot.lane.b32.xlu0 %v1027, 15
    %v1252 = vpop.permute.xlu0 %1251
    %1253 = vrot.lane.b32.xlu0 %v1026, 15
    %v1254 = vpop.permute.xlu0 %1253
    %1255 = vrot.lane.b32.xlu0 %v1028, 15
    %v1256 = vpop.permute.xlu0 %1255
    %v1257 = vsel %vm267, %v1250, %v1254
    %v1258 = vsel %vm267, %v1252, %v1256
    %v1259 = vsel %vm267, %v1254, %v1250
    %v1260 = vsel %vm267, %v1256, %v1252
    %v1261 = vmul.f32 %v1259, %v276
    %v1262 = vmul.f32 %v1257, %v280
    %v1263 = vmul.f32 %v1260, %v276
    %v1264 = vmul.f32 %v1258, %v280
    %s1265 = scalar_lea.vmem %s3, 32
    %v1266 = vld [vmem:[%s1265] sm:$0xff]
    %v1267 = vld [vmem:[%s1265 + $0x8] sm:$0xff]
    %v1269 = vsel %vm1055, %v1266, 0
    %v1272 = vsel %vm1055, %v1267, 0
    %1274 = vmatprep.subr.mxu0 0.0
    %1275 = vmatpush1.msra.mxu0 0.0
    %1276 = vmatprep.subr.mxu0 0.0
    %1277 = vmatpush1.msra.mxu0 0.0
    %1278 = vmatprep.subr.mxu0 0.0
    %1279 = vmatpush1.msra.mxu0 0.0
    %1280 = vmatprep.subr.mxu0 0.0
    %1281 = vmatpush1.msra.mxu0 0.0
    %1282 = vmatprep.subr.mxu0 0.0
    %1283 = vmatpush1.msra.mxu0 0.0
    %1284 = vmatprep.subr.mxu0 0.0
    %1285 = vmatpush1.msra.mxu0 0.0
    %1286 = vmatprep.subr.mxu0 0.0
    %1287 = vmatpush1.msra.mxu0 0.0
    %1288 = vmatprep.subr.mxu0 0.0
    %1289 = vmatpush1.msra.mxu0 0.0
    %1290 = vmatprep.subr.mxu0 0.0
    %1291 = vmatpush1.msra.mxu0 0.0
    %1292 = vmatprep.subr.mxu0 0.0
    %1293 = vmatpush1.msra.mxu0 0.0
    %1294 = vmatprep.subr.mxu0 0.0
    %1295 = vmatpush1.msra.mxu0 0.0
    %1296 = vmatprep.subr.mxu0 0.0
    %1297 = vmatpush1.msra.mxu0 0.0
    %1298 = vmatprep.subr.mxu0 0.0
    %1299 = vmatpush1.msra.mxu0 0.0
    %1300 = vmatprep.subr.mxu0 0.0
    %1301 = vmatpush1.msra.mxu0 0.0
    %1302 = vmatprep.subr.mxu0 %v1264
    %1303 = vmatpush1.msra.mxu0 %v1263
    %1304 = vmatprep.subr.mxu0 %v1262
    %1305 = vmatpush1.msra.mxu0 %v1261
    %1306 = vmatprep.subr.mxu0 0.0
    %1307 = vmatpush2.msra.mxu0 0.0
    %1308 = vmatprep.subr.mxu0 0.0
    %1309 = vmatpush2.msra.mxu0 0.0
    %1310 = vmatprep.subr.mxu0 0.0
    %1311 = vmatpush2.msra.mxu0 0.0
    %1312 = vmatprep.subr.mxu0 0.0
    %1313 = vmatpush2.msra.mxu0 0.0
    %1314 = vmatprep.subr.mxu0 0.0
    %1315 = vmatpush2.msra.mxu0 0.0
    %1316 = vmatprep.subr.mxu0 0.0
    %1317 = vmatpush2.msra.mxu0 0.0
    %1318 = vmatprep.subr.mxu0 0.0
    %1319 = vmatpush2.msra.mxu0 0.0
    %1320 = vmatprep.subr.mxu0 0.0
    %1321 = vmatpush2.msra.mxu0 0.0
    %1322 = vmatprep.subr.mxu0 0.0
    %1323 = vmatpush2.msra.mxu0 0.0
    %1324 = vmatprep.subr.mxu0 0.0
    %1325 = vmatpush2.msra.mxu0 0.0
    %1326 = vmatprep.subr.mxu0 0.0
    %1327 = vmatpush2.msra.mxu0 0.0
    %1328 = vmatprep.subr.mxu0 0.0
    %1329 = vmatpush2.msra.mxu0 0.0
    %1330 = vmatprep.subr.mxu0 0.0
    %1331 = vmatpush2.msra.mxu0 0.0
    %1332 = vmatprep.subr.mxu0 0.0
    %1333 = vmatpush2.msra.mxu0 0.0
    %1334 = vmatprep.subr.mxu0 0.0
    %1335 = vmatpush2.msra.mxu0 0.0
    %1336 = vmatprep.subr.mxu0 0.0
    %1337 = vmatpush2.msra.mxu0 0.0
    %1338 = vmatprep.mubr.f32.mxu0 0.0
    %1339 = vmatmul.mubr.f32.gmra.mxu0 %v1269
    %v1340 = vpop.f32.mrf.mxu0
    %v1341 = vadd.f32 0.0, %v1340
    %v1342 = vpop.f32.mrf.mxu0
    %v1343 = vadd.f32 0.0, %v1342
    %1344 = vmatprep.mubr.f32.mxu0 0.0
    %1345 = vmatmul.mubr.f32.gmra.mxu0 %v1272
    %v1346 = vpop.f32.mrf.mxu0
    %v1347 = vadd.f32 0.0, %v1346
    %v1348 = vpop.f32.mrf.mxu0
    %v1349 = vadd.f32 0.0, %v1348
    %1350 = vdwg.mxu0
    %v1351 = vadd.f32 %v1245, %v1341
    %v1352 = vadd.f32 %v1246, %v1343
    %v1353 = vadd.f32 %v1247, %v1347
    %v1354 = vadd.f32 %v1248, %v1349
    %1355 = vrot.lane.b32.xlu0 %v1025, 1
    %v1356 = vpop.permute.xlu0 %1355
    %1357 = vrot.lane.b32.xlu0 %v1027, 1
    %v1358 = vpop.permute.xlu0 %1357
    %1359 = vrot.lane.b32.xlu0 %v1026, 1
    %v1360 = vpop.permute.xlu0 %1359
    %1361 = vrot.lane.b32.xlu0 %v1028, 1
    %v1362 = vpop.permute.xlu0 %1361
    %v1363 = vsel %vm379, %v1356, %v1360
    %v1364 = vsel %vm379, %v1358, %v1362
    %v1365 = vsel %vm379, %v1360, %v1356
    %v1366 = vsel %vm379, %v1362, %v1358
    %v1367 = vmul.f32 %v1365, %v388
    %v1368 = vmul.f32 %v1363, %v392
    %v1369 = vmul.f32 %v1366, %v388
    %v1370 = vmul.f32 %v1364, %v392
    %s1371 = scalar_lea.vmem %s3, 48
    %v1372 = vld [vmem:[%s1371] sm:$0xff]
    %v1373 = vld [vmem:[%s1371 + $0x8] sm:$0xff]
    %v1375 = vsel %vm1055, %v1372, 0
    %v1378 = vsel %vm1055, %v1373, 0
    %1380 = vmatprep.subr.mxu0 0.0
    %1381 = vmatpush1.msra.mxu0 0.0
    %1382 = vmatprep.subr.mxu0 0.0
    %1383 = vmatpush1.msra.mxu0 0.0
    %1384 = vmatprep.subr.mxu0 0.0
    %1385 = vmatpush1.msra.mxu0 0.0
    %1386 = vmatprep.subr.mxu0 0.0
    %1387 = vmatpush1.msra.mxu0 0.0
    %1388 = vmatprep.subr.mxu0 0.0
    %1389 = vmatpush1.msra.mxu0 0.0
    %1390 = vmatprep.subr.mxu0 0.0
    %1391 = vmatpush1.msra.mxu0 0.0
    %1392 = vmatprep.subr.mxu0 0.0
    %1393 = vmatpush1.msra.mxu0 0.0
    %1394 = vmatprep.subr.mxu0 0.0
    %1395 = vmatpush1.msra.mxu0 0.0
    %1396 = vmatprep.subr.mxu0 0.0
    %1397 = vmatpush1.msra.mxu0 0.0
    %1398 = vmatprep.subr.mxu0 0.0
    %1399 = vmatpush1.msra.mxu0 0.0
    %1400 = vmatprep.subr.mxu0 0.0
    %1401 = vmatpush1.msra.mxu0 0.0
    %1402 = vmatprep.subr.mxu0 0.0
    %1403 = vmatpush1.msra.mxu0 0.0
    %1404 = vmatprep.subr.mxu0 0.0
    %1405 = vmatpush1.msra.mxu0 0.0
    %1406 = vmatprep.subr.mxu0 0.0
    %1407 = vmatpush1.msra.mxu0 0.0
    %1408 = vmatprep.subr.mxu0 %v1370
    %1409 = vmatpush1.msra.mxu0 %v1369
    %1410 = vmatprep.subr.mxu0 %v1368
    %1411 = vmatpush1.msra.mxu0 %v1367
    %1412 = vmatprep.subr.mxu0 0.0
    %1413 = vmatpush2.msra.mxu0 0.0
    %1414 = vmatprep.subr.mxu0 0.0
    %1415 = vmatpush2.msra.mxu0 0.0
    %1416 = vmatprep.subr.mxu0 0.0
    %1417 = vmatpush2.msra.mxu0 0.0
    %1418 = vmatprep.subr.mxu0 0.0
    %1419 = vmatpush2.msra.mxu0 0.0
    %1420 = vmatprep.subr.mxu0 0.0
    %1421 = vmatpush2.msra.mxu0 0.0
    %1422 = vmatprep.subr.mxu0 0.0
    %1423 = vmatpush2.msra.mxu0 0.0
    %1424 = vmatprep.subr.mxu0 0.0
    %1425 = vmatpush2.msra.mxu0 0.0
    %1426 = vmatprep.subr.mxu0 0.0
    %1427 = vmatpush2.msra.mxu0 0.0
    %1428 = vmatprep.subr.mxu0 0.0
    %1429 = vmatpush2.msra.mxu0 0.0
    %1430 = vmatprep.subr.mxu0 0.0
    %1431 = vmatpush2.msra.mxu0 0.0
    %1432 = vmatprep.subr.mxu0 0.0
    %1433 = vmatpush2.msra.mxu0 0.0
    %1434 = vmatprep.subr.mxu0 0.0
    %1435 = vmatpush2.msra.mxu0 0.0
    %1436 = vmatprep.subr.mxu0 0.0
    %1437 = vmatpush2.msra.mxu0 0.0
    %1438 = vmatprep.subr.mxu0 0.0
    %1439 = vmatpush2.msra.mxu0 0.0
    %1440 = vmatprep.subr.mxu0 0.0
    %1441 = vmatpush2.msra.mxu0 0.0
    %1442 = vmatprep.subr.mxu0 0.0
    %1443 = vmatpush2.msra.mxu0 0.0
    %1444 = vmatprep.mubr.f32.mxu0 0.0
    %1445 = vmatmul.mubr.f32.gmra.mxu0 %v1375
    %v1446 = vpop.f32.mrf.mxu0
    %v1447 = vadd.f32 0.0, %v1446
    %v1448 = vpop.f32.mrf.mxu0
    %v1449 = vadd.f32 0.0, %v1448
    %1450 = vmatprep.mubr.f32.mxu0 0.0
    %1451 = vmatmul.mubr.f32.gmra.mxu0 %v1378
    %v1452 = vpop.f32.mrf.mxu0
    %v1453 = vadd.f32 0.0, %v1452
    %v1454 = vpop.f32.mrf.mxu0
    %v1455 = vadd.f32 0.0, %v1454
    %1456 = vdwg.mxu0
    %v1457 = vadd.f32 %v1351, %v1447
    %v1458 = vadd.f32 %v1352, %v1449
    %v1459 = vadd.f32 %v1353, %v1453
    %v1460 = vadd.f32 %v1354, %v1455
    %s1461 = scalar_lea.vmem %s3, 64
    %v1462 = vld [vmem:[%s1461] sm:$0xff]
    %v1463 = vld [vmem:[%s1461 + $0x8] sm:$0xff]
    %v1465 = vsel %vm1055, %v1462, 0
    %v1468 = vsel %vm1055, %v1463, 0
    %1470 = vmatprep.subr.mxu0 0.0
    %1471 = vmatpush1.msra.mxu0 0.0
    %1472 = vmatprep.subr.mxu0 0.0
    %1473 = vmatpush1.msra.mxu0 0.0
    %1474 = vmatprep.subr.mxu0 0.0
    %1475 = vmatpush1.msra.mxu0 0.0
    %1476 = vmatprep.subr.mxu0 0.0
    %1477 = vmatpush1.msra.mxu0 0.0
    %1478 = vmatprep.subr.mxu0 0.0
    %1479 = vmatpush1.msra.mxu0 0.0
    %1480 = vmatprep.subr.mxu0 0.0
    %1481 = vmatpush1.msra.mxu0 0.0
    %1482 = vmatprep.subr.mxu0 0.0
    %1483 = vmatpush1.msra.mxu0 0.0
    %1484 = vmatprep.subr.mxu0 0.0
    %1485 = vmatpush1.msra.mxu0 0.0
    %1486 = vmatprep.subr.mxu0 0.0
    %1487 = vmatpush1.msra.mxu0 0.0
    %1488 = vmatprep.subr.mxu0 0.0
    %1489 = vmatpush1.msra.mxu0 0.0
    %1490 = vmatprep.subr.mxu0 0.0
    %1491 = vmatpush1.msra.mxu0 0.0
    %1492 = vmatprep.subr.mxu0 0.0
    %1493 = vmatpush1.msra.mxu0 0.0
    %1494 = vmatprep.subr.mxu0 0.0
    %1495 = vmatpush1.msra.mxu0 0.0
    %1496 = vmatprep.subr.mxu0 0.0
    %1497 = vmatpush1.msra.mxu0 0.0
    %1498 = vmatprep.subr.mxu0 %v1028
    %1499 = vmatpush1.msra.mxu0 %v1027
    %1500 = vmatprep.subr.mxu0 %v1026
    %1501 = vmatpush1.msra.mxu0 %v1025
    %1502 = vmatprep.subr.mxu0 0.0
    %1503 = vmatpush2.msra.mxu0 0.0
    %1504 = vmatprep.subr.mxu0 0.0
    %1505 = vmatpush2.msra.mxu0 0.0
    %1506 = vmatprep.subr.mxu0 0.0
    %1507 = vmatpush2.msra.mxu0 0.0
    %1508 = vmatprep.subr.mxu0 0.0
    %1509 = vmatpush2.msra.mxu0 0.0
    %1510 = vmatprep.subr.mxu0 0.0
    %1511 = vmatpush2.msra.mxu0 0.0
    %1512 = vmatprep.subr.mxu0 0.0
    %1513 = vmatpush2.msra.mxu0 0.0
    %1514 = vmatprep.subr.mxu0 0.0
    %1515 = vmatpush2.msra.mxu0 0.0
    %1516 = vmatprep.subr.mxu0 0.0
    %1517 = vmatpush2.msra.mxu0 0.0
    %1518 = vmatprep.subr.mxu0 0.0
    %1519 = vmatpush2.msra.mxu0 0.0
    %1520 = vmatprep.subr.mxu0 0.0
    %1521 = vmatpush2.msra.mxu0 0.0
    %1522 = vmatprep.subr.mxu0 0.0
    %1523 = vmatpush2.msra.mxu0 0.0
    %1524 = vmatprep.subr.mxu0 0.0
    %1525 = vmatpush2.msra.mxu0 0.0
    %1526 = vmatprep.subr.mxu0 0.0
    %1527 = vmatpush2.msra.mxu0 0.0
    %1528 = vmatprep.subr.mxu0 0.0
    %1529 = vmatpush2.msra.mxu0 0.0
    %1530 = vmatprep.subr.mxu0 0.0
    %1531 = vmatpush2.msra.mxu0 0.0
    %1532 = vmatprep.subr.mxu0 0.0
    %1533 = vmatpush2.msra.mxu0 0.0
    %1534 = vmatprep.mubr.f32.mxu0 0.0
    %1535 = vmatmul.mubr.f32.gmra.mxu0 %v1465
    %v1536 = vpop.f32.mrf.mxu0
    %v1537 = vadd.f32 0.0, %v1536
    %v1538 = vpop.f32.mrf.mxu0
    %v1539 = vadd.f32 0.0, %v1538
    %1540 = vmatprep.mubr.f32.mxu0 0.0
    %1541 = vmatmul.mubr.f32.gmra.mxu0 %v1468
    %v1542 = vpop.f32.mrf.mxu0
    %v1543 = vadd.f32 0.0, %v1542
    %v1544 = vpop.f32.mrf.mxu0
    %v1545 = vadd.f32 0.0, %v1544
    %1546 = vdwg.mxu0
    %v1547 = vadd.f32 %v1457, %v1537
    %v1548 = vadd.f32 %v1458, %v1539
    %v1549 = vadd.f32 %v1459, %v1543
    %v1550 = vadd.f32 %v1460, %v1545
    %1551 = vrot.lane.b32.xlu0 %v1025, 127
    %v1552 = vpop.permute.xlu0 %1551
    %1553 = vrot.lane.b32.xlu0 %v1027, 127
    %v1554 = vpop.permute.xlu0 %1553
    %1555 = vrot.lane.b32.xlu0 %v1026, 127
    %v1556 = vpop.permute.xlu0 %1555
    %1557 = vrot.lane.b32.xlu0 %v1028, 127
    %v1558 = vpop.permute.xlu0 %1557
    %v1559 = vsel %vm581, %v1552, %v1556
    %v1560 = vsel %vm581, %v1554, %v1558
    %v1561 = vsel %vm581, %v1556, %v1552
    %v1562 = vsel %vm581, %v1558, %v1554
    %v1563 = vmul.f32 %v1559, %v590
    %v1564 = vmul.f32 %v1561, %v594
    %v1565 = vmul.f32 %v1560, %v590
    %v1566 = vmul.f32 %v1562, %v594
    %s1567 = scalar_lea.vmem %s3, 80
    %v1568 = vld [vmem:[%s1567] sm:$0xff]
    %v1569 = vld [vmem:[%s1567 + $0x8] sm:$0xff]
    %v1571 = vsel %vm1055, %v1568, 0
    %v1574 = vsel %vm1055, %v1569, 0
    %1576 = vmatprep.subr.mxu0 0.0
    %1577 = vmatpush1.msra.mxu0 0.0
    %1578 = vmatprep.subr.mxu0 0.0
    %1579 = vmatpush1.msra.mxu0 0.0
    %1580 = vmatprep.subr.mxu0 0.0
    %1581 = vmatpush1.msra.mxu0 0.0
    %1582 = vmatprep.subr.mxu0 0.0
    %1583 = vmatpush1.msra.mxu0 0.0
    %1584 = vmatprep.subr.mxu0 0.0
    %1585 = vmatpush1.msra.mxu0 0.0
    %1586 = vmatprep.subr.mxu0 0.0
    %1587 = vmatpush1.msra.mxu0 0.0
    %1588 = vmatprep.subr.mxu0 0.0
    %1589 = vmatpush1.msra.mxu0 0.0
    %1590 = vmatprep.subr.mxu0 0.0
    %1591 = vmatpush1.msra.mxu0 0.0
    %1592 = vmatprep.subr.mxu0 0.0
    %1593 = vmatpush1.msra.mxu0 0.0
    %1594 = vmatprep.subr.mxu0 0.0
    %1595 = vmatpush1.msra.mxu0 0.0
    %1596 = vmatprep.subr.mxu0 0.0
    %1597 = vmatpush1.msra.mxu0 0.0
    %1598 = vmatprep.subr.mxu0 0.0
    %1599 = vmatpush1.msra.mxu0 0.0
    %1600 = vmatprep.subr.mxu0 0.0
    %1601 = vmatpush1.msra.mxu0 0.0
    %1602 = vmatprep.subr.mxu0 0.0
    %1603 = vmatpush1.msra.mxu0 0.0
    %1604 = vmatprep.subr.mxu0 %v1566
    %1605 = vmatpush1.msra.mxu0 %v1565
    %1606 = vmatprep.subr.mxu0 %v1564
    %1607 = vmatpush1.msra.mxu0 %v1563
    %1608 = vmatprep.subr.mxu0 0.0
    %1609 = vmatpush2.msra.mxu0 0.0
    %1610 = vmatprep.subr.mxu0 0.0
    %1611 = vmatpush2.msra.mxu0 0.0
    %1612 = vmatprep.subr.mxu0 0.0
    %1613 = vmatpush2.msra.mxu0 0.0
    %1614 = vmatprep.subr.mxu0 0.0
    %1615 = vmatpush2.msra.mxu0 0.0
    %1616 = vmatprep.subr.mxu0 0.0
    %1617 = vmatpush2.msra.mxu0 0.0
    %1618 = vmatprep.subr.mxu0 0.0
    %1619 = vmatpush2.msra.mxu0 0.0
    %1620 = vmatprep.subr.mxu0 0.0
    %1621 = vmatpush2.msra.mxu0 0.0
    %1622 = vmatprep.subr.mxu0 0.0
    %1623 = vmatpush2.msra.mxu0 0.0
    %1624 = vmatprep.subr.mxu0 0.0
    %1625 = vmatpush2.msra.mxu0 0.0
    %1626 = vmatprep.subr.mxu0 0.0
    %1627 = vmatpush2.msra.mxu0 0.0
    %1628 = vmatprep.subr.mxu0 0.0
    %1629 = vmatpush2.msra.mxu0 0.0
    %1630 = vmatprep.subr.mxu0 0.0
    %1631 = vmatpush2.msra.mxu0 0.0
    %1632 = vmatprep.subr.mxu0 0.0
    %1633 = vmatpush2.msra.mxu0 0.0
    %1634 = vmatprep.subr.mxu0 0.0
    %1635 = vmatpush2.msra.mxu0 0.0
    %1636 = vmatprep.subr.mxu0 0.0
    %1637 = vmatpush2.msra.mxu0 0.0
    %1638 = vmatprep.subr.mxu0 0.0
    %1639 = vmatpush2.msra.mxu0 0.0
    %1640 = vmatprep.mubr.f32.mxu0 0.0
    %1641 = vmatmul.mubr.f32.gmra.mxu0 %v1571
    %v1642 = vpop.f32.mrf.mxu0
    %v1643 = vadd.f32 0.0, %v1642
    %v1644 = vpop.f32.mrf.mxu0
    %v1645 = vadd.f32 0.0, %v1644
    %1646 = vmatprep.mubr.f32.mxu0 0.0
    %1647 = vmatmul.mubr.f32.gmra.mxu0 %v1574
    %v1648 = vpop.f32.mrf.mxu0
    %v1649 = vadd.f32 0.0, %v1648
    %v1650 = vpop.f32.mrf.mxu0
    %v1651 = vadd.f32 0.0, %v1650
    %1652 = vdwg.mxu0
    %v1653 = vadd.f32 %v1547, %v1643
    %v1654 = vadd.f32 %v1548, %v1645
    %v1655 = vadd.f32 %v1549, %v1649
    %v1656 = vadd.f32 %v1550, %v1651
    %1657 = vrot.lane.b32.xlu0 %v1025, 113
    %v1658 = vpop.permute.xlu0 %1657
    %1659 = vrot.lane.b32.xlu0 %v1027, 113
    %v1660 = vpop.permute.xlu0 %1659
    %1661 = vrot.lane.b32.xlu0 %v1026, 113
    %v1662 = vpop.permute.xlu0 %1661
    %1663 = vrot.lane.b32.xlu0 %v1028, 113
    %v1664 = vpop.permute.xlu0 %1663
    %v1665 = vsel %vm693, %v1658, %v1662
    %v1666 = vsel %vm693, %v1660, %v1664
    %v1667 = vsel %vm693, %v1662, %v1658
    %v1668 = vsel %vm693, %v1664, %v1660
    %v1669 = vmul.f32 %v1665, %v702
    %v1670 = vmul.f32 %v1667, %v706
    %v1671 = vmul.f32 %v1666, %v702
    %v1672 = vmul.f32 %v1668, %v706
    %s1673 = scalar_lea.vmem %s3, 96
    %v1674 = vld [vmem:[%s1673] sm:$0xff]
    %v1675 = vld [vmem:[%s1673 + $0x8] sm:$0xff]
    %v1677 = vsel %vm1055, %v1674, 0
    %v1680 = vsel %vm1055, %v1675, 0
    %1682 = vmatprep.subr.mxu0 0.0
    %1683 = vmatpush1.msra.mxu0 0.0
    %1684 = vmatprep.subr.mxu0 0.0
    %1685 = vmatpush1.msra.mxu0 0.0
    %1686 = vmatprep.subr.mxu0 0.0
    %1687 = vmatpush1.msra.mxu0 0.0
    %1688 = vmatprep.subr.mxu0 0.0
    %1689 = vmatpush1.msra.mxu0 0.0
    %1690 = vmatprep.subr.mxu0 0.0
    %1691 = vmatpush1.msra.mxu0 0.0
    %1692 = vmatprep.subr.mxu0 0.0
    %1693 = vmatpush1.msra.mxu0 0.0
    %1694 = vmatprep.subr.mxu0 0.0
    %1695 = vmatpush1.msra.mxu0 0.0
    %1696 = vmatprep.subr.mxu0 0.0
    %1697 = vmatpush1.msra.mxu0 0.0
    %1698 = vmatprep.subr.mxu0 0.0
    %1699 = vmatpush1.msra.mxu0 0.0
    %1700 = vmatprep.subr.mxu0 0.0
    %1701 = vmatpush1.msra.mxu0 0.0
    %1702 = vmatprep.subr.mxu0 0.0
    %1703 = vmatpush1.msra.mxu0 0.0
    %1704 = vmatprep.subr.mxu0 0.0
    %1705 = vmatpush1.msra.mxu0 0.0
    %1706 = vmatprep.subr.mxu0 0.0
    %1707 = vmatpush1.msra.mxu0 0.0
    %1708 = vmatprep.subr.mxu0 0.0
    %1709 = vmatpush1.msra.mxu0 0.0
    %1710 = vmatprep.subr.mxu0 %v1672
    %1711 = vmatpush1.msra.mxu0 %v1671
    %1712 = vmatprep.subr.mxu0 %v1670
    %1713 = vmatpush1.msra.mxu0 %v1669
    %1714 = vmatprep.subr.mxu0 0.0
    %1715 = vmatpush2.msra.mxu0 0.0
    %1716 = vmatprep.subr.mxu0 0.0
    %1717 = vmatpush2.msra.mxu0 0.0
    %1718 = vmatprep.subr.mxu0 0.0
    %1719 = vmatpush2.msra.mxu0 0.0
    %1720 = vmatprep.subr.mxu0 0.0
    %1721 = vmatpush2.msra.mxu0 0.0
    %1722 = vmatprep.subr.mxu0 0.0
    %1723 = vmatpush2.msra.mxu0 0.0
    %1724 = vmatprep.subr.mxu0 0.0
    %1725 = vmatpush2.msra.mxu0 0.0
    %1726 = vmatprep.subr.mxu0 0.0
    %1727 = vmatpush2.msra.mxu0 0.0
    %1728 = vmatprep.subr.mxu0 0.0
    %1729 = vmatpush2.msra.mxu0 0.0
    %1730 = vmatprep.subr.mxu0 0.0
    %1731 = vmatpush2.msra.mxu0 0.0
    %1732 = vmatprep.subr.mxu0 0.0
    %1733 = vmatpush2.msra.mxu0 0.0
    %1734 = vmatprep.subr.mxu0 0.0
    %1735 = vmatpush2.msra.mxu0 0.0
    %1736 = vmatprep.subr.mxu0 0.0
    %1737 = vmatpush2.msra.mxu0 0.0
    %1738 = vmatprep.subr.mxu0 0.0
    %1739 = vmatpush2.msra.mxu0 0.0
    %1740 = vmatprep.subr.mxu0 0.0
    %1741 = vmatpush2.msra.mxu0 0.0
    %1742 = vmatprep.subr.mxu0 0.0
    %1743 = vmatpush2.msra.mxu0 0.0
    %1744 = vmatprep.subr.mxu0 0.0
    %1745 = vmatpush2.msra.mxu0 0.0
    %1746 = vmatprep.mubr.f32.mxu0 0.0
    %1747 = vmatmul.mubr.f32.gmra.mxu0 %v1677
    %v1748 = vpop.f32.mrf.mxu0
    %v1749 = vadd.f32 0.0, %v1748
    %v1750 = vpop.f32.mrf.mxu0
    %v1751 = vadd.f32 0.0, %v1750
    %1752 = vmatprep.mubr.f32.mxu0 0.0
    %1753 = vmatmul.mubr.f32.gmra.mxu0 %v1680
    %v1754 = vpop.f32.mrf.mxu0
    %v1755 = vadd.f32 0.0, %v1754
    %v1756 = vpop.f32.mrf.mxu0
    %v1757 = vadd.f32 0.0, %v1756
    %1758 = vdwg.mxu0
    %v1759 = vadd.f32 %v1653, %v1749
    %v1760 = vadd.f32 %v1654, %v1751
    %v1761 = vadd.f32 %v1655, %v1755
    %v1762 = vadd.f32 %v1656, %v1757
    %1763 = vrot.lane.b32.xlu0 %v1025, 112
    %v1764 = vpop.permute.xlu0 %1763
    %1765 = vrot.lane.b32.xlu0 %v1027, 112
    %v1766 = vpop.permute.xlu0 %1765
    %1767 = vrot.lane.b32.xlu0 %v1026, 112
    %v1768 = vpop.permute.xlu0 %1767
    %1769 = vrot.lane.b32.xlu0 %v1028, 112
    %v1770 = vpop.permute.xlu0 %1769
    %v1771 = vsel %vm805, %v1764, %v1768
    %v1772 = vsel %vm805, %v1766, %v1770
    %v1773 = vsel %vm805, %v1768, %v1764
    %v1774 = vsel %vm805, %v1770, %v1766
    %v1775 = vmul.f32 %v1771, %v814
    %v1776 = vmul.f32 %v1773, %v818
    %v1777 = vmul.f32 %v1772, %v814
    %v1778 = vmul.f32 %v1774, %v818
    %s1779 = scalar_lea.vmem %s3, 112
    %v1780 = vld [vmem:[%s1779] sm:$0xff]
    %v1781 = vld [vmem:[%s1779 + $0x8] sm:$0xff]
    %v1783 = vsel %vm1055, %v1780, 0
    %v1786 = vsel %vm1055, %v1781, 0
    %1788 = vmatprep.subr.mxu0 0.0
    %1789 = vmatpush1.msra.mxu0 0.0
    %1790 = vmatprep.subr.mxu0 0.0
    %1791 = vmatpush1.msra.mxu0 0.0
    %1792 = vmatprep.subr.mxu0 0.0
    %1793 = vmatpush1.msra.mxu0 0.0
    %1794 = vmatprep.subr.mxu0 0.0
    %1795 = vmatpush1.msra.mxu0 0.0
    %1796 = vmatprep.subr.mxu0 0.0
    %1797 = vmatpush1.msra.mxu0 0.0
    %1798 = vmatprep.subr.mxu0 0.0
    %1799 = vmatpush1.msra.mxu0 0.0
    %1800 = vmatprep.subr.mxu0 0.0
    %1801 = vmatpush1.msra.mxu0 0.0
    %1802 = vmatprep.subr.mxu0 0.0
    %1803 = vmatpush1.msra.mxu0 0.0
    %1804 = vmatprep.subr.mxu0 0.0
    %1805 = vmatpush1.msra.mxu0 0.0
    %1806 = vmatprep.subr.mxu0 0.0
    %1807 = vmatpush1.msra.mxu0 0.0
    %1808 = vmatprep.subr.mxu0 0.0
    %1809 = vmatpush1.msra.mxu0 0.0
    %1810 = vmatprep.subr.mxu0 0.0
    %1811 = vmatpush1.msra.mxu0 0.0
    %1812 = vmatprep.subr.mxu0 0.0
    %1813 = vmatpush1.msra.mxu0 0.0
    %1814 = vmatprep.subr.mxu0 0.0
    %1815 = vmatpush1.msra.mxu0 0.0
    %1816 = vmatprep.subr.mxu0 %v1778
    %1817 = vmatpush1.msra.mxu0 %v1777
    %1818 = vmatprep.subr.mxu0 %v1776
    %1819 = vmatpush1.msra.mxu0 %v1775
    %1820 = vmatprep.subr.mxu0 0.0
    %1821 = vmatpush2.msra.mxu0 0.0
    %1822 = vmatprep.subr.mxu0 0.0
    %1823 = vmatpush2.msra.mxu0 0.0
    %1824 = vmatprep.subr.mxu0 0.0
    %1825 = vmatpush2.msra.mxu0 0.0
    %1826 = vmatprep.subr.mxu0 0.0
    %1827 = vmatpush2.msra.mxu0 0.0
    %1828 = vmatprep.subr.mxu0 0.0
    %1829 = vmatpush2.msra.mxu0 0.0
    %1830 = vmatprep.subr.mxu0 0.0
    %1831 = vmatpush2.msra.mxu0 0.0
    %1832 = vmatprep.subr.mxu0 0.0
    %1833 = vmatpush2.msra.mxu0 0.0
    %1834 = vmatprep.subr.mxu0 0.0
    %1835 = vmatpush2.msra.mxu0 0.0
    %1836 = vmatprep.subr.mxu0 0.0
    %1837 = vmatpush2.msra.mxu0 0.0
    %1838 = vmatprep.subr.mxu0 0.0
    %1839 = vmatpush2.msra.mxu0 0.0
    %1840 = vmatprep.subr.mxu0 0.0
    %1841 = vmatpush2.msra.mxu0 0.0
    %1842 = vmatprep.subr.mxu0 0.0
    %1843 = vmatpush2.msra.mxu0 0.0
    %1844 = vmatprep.subr.mxu0 0.0
    %1845 = vmatpush2.msra.mxu0 0.0
    %1846 = vmatprep.subr.mxu0 0.0
    %1847 = vmatpush2.msra.mxu0 0.0
    %1848 = vmatprep.subr.mxu0 0.0
    %1849 = vmatpush2.msra.mxu0 0.0
    %1850 = vmatprep.subr.mxu0 0.0
    %1851 = vmatpush2.msra.mxu0 0.0
    %1852 = vmatprep.mubr.f32.mxu0 0.0
    %1853 = vmatmul.mubr.f32.gmra.mxu0 %v1783
    %v1854 = vpop.f32.mrf.mxu0
    %v1855 = vadd.f32 0.0, %v1854
    %v1856 = vpop.f32.mrf.mxu0
    %v1857 = vadd.f32 0.0, %v1856
    %1858 = vmatprep.mubr.f32.mxu0 0.0
    %1859 = vmatmul.mubr.f32.gmra.mxu0 %v1786
    %v1860 = vpop.f32.mrf.mxu0
    %v1861 = vadd.f32 0.0, %v1860
    %v1862 = vpop.f32.mrf.mxu0
    %v1863 = vadd.f32 0.0, %v1862
    %1864 = vdwg.mxu0
    %v1865 = vadd.f32 %v1759, %v1855
    %v1866 = vadd.f32 %v1760, %v1857
    %v1867 = vadd.f32 %v1761, %v1861
    %v1868 = vadd.f32 %v1762, %v1863
    %1869 = vrot.lane.b32.xlu0 %v1025, 111
    %v1870 = vpop.permute.xlu0 %1869
    %1871 = vrot.lane.b32.xlu0 %v1027, 111
    %v1872 = vpop.permute.xlu0 %1871
    %1873 = vrot.lane.b32.xlu0 %v1026, 111
    %v1874 = vpop.permute.xlu0 %1873
    %1875 = vrot.lane.b32.xlu0 %v1028, 111
    %v1876 = vpop.permute.xlu0 %1875
    %v1877 = vsel %vm917, %v1870, %v1874
    %v1878 = vsel %vm917, %v1872, %v1876
    %v1879 = vsel %vm917, %v1874, %v1870
    %v1880 = vsel %vm917, %v1876, %v1872
    %v1881 = vmul.f32 %v1877, %v926
    %v1882 = vmul.f32 %v1879, %v930
    %v1883 = vmul.f32 %v1878, %v926
    %v1884 = vmul.f32 %v1880, %v930
    %s1885 = scalar_lea.vmem %s3, 128
    %v1886 = vld [vmem:[%s1885] sm:$0xff]
    %v1887 = vld [vmem:[%s1885 + $0x8] sm:$0xff]
    %v1889 = vsel %vm1055, %v1886, 0
    %v1892 = vsel %vm1055, %v1887, 0
    %1894 = vmatprep.subr.mxu0 0.0
    %1895 = vmatpush1.msra.mxu0 0.0
    %1896 = vmatprep.subr.mxu0 0.0
    %1897 = vmatpush1.msra.mxu0 0.0
    %1898 = vmatprep.subr.mxu0 0.0
    %1899 = vmatpush1.msra.mxu0 0.0
    %1900 = vmatprep.subr.mxu0 0.0
    %1901 = vmatpush1.msra.mxu0 0.0
    %1902 = vmatprep.subr.mxu0 0.0
    %1903 = vmatpush1.msra.mxu0 0.0
    %1904 = vmatprep.subr.mxu0 0.0
    %1905 = vmatpush1.msra.mxu0 0.0
    %1906 = vmatprep.subr.mxu0 0.0
    %1907 = vmatpush1.msra.mxu0 0.0
    %1908 = vmatprep.subr.mxu0 0.0
    %1909 = vmatpush1.msra.mxu0 0.0
    %1910 = vmatprep.subr.mxu0 0.0
    %1911 = vmatpush1.msra.mxu0 0.0
    %1912 = vmatprep.subr.mxu0 0.0
    %1913 = vmatpush1.msra.mxu0 0.0
    %1914 = vmatprep.subr.mxu0 0.0
    %1915 = vmatpush1.msra.mxu0 0.0
    %1916 = vmatprep.subr.mxu0 0.0
    %1917 = vmatpush1.msra.mxu0 0.0
    %1918 = vmatprep.subr.mxu0 0.0
    %1919 = vmatpush1.msra.mxu0 0.0
    %1920 = vmatprep.subr.mxu0 0.0
    %1921 = vmatpush1.msra.mxu0 0.0
    %1922 = vmatprep.subr.mxu0 %v1884
    %1923 = vmatpush1.msra.mxu0 %v1883
    %1924 = vmatprep.subr.mxu0 %v1882
    %1925 = vmatpush1.msra.mxu0 %v1881
    %1926 = vmatprep.subr.mxu0 0.0
    %1927 = vmatpush2.msra.mxu0 0.0
    %1928 = vmatprep.subr.mxu0 0.0
    %1929 = vmatpush2.msra.mxu0 0.0
    %1930 = vmatprep.subr.mxu0 0.0
    %1931 = vmatpush2.msra.mxu0 0.0
    %1932 = vmatprep.subr.mxu0 0.0
    %1933 = vmatpush2.msra.mxu0 0.0
    %1934 = vmatprep.subr.mxu0 0.0
    %1935 = vmatpush2.msra.mxu0 0.0
    %1936 = vmatprep.subr.mxu0 0.0
    %1937 = vmatpush2.msra.mxu0 0.0
    %1938 = vmatprep.subr.mxu0 0.0
    %1939 = vmatpush2.msra.mxu0 0.0
    %1940 = vmatprep.subr.mxu0 0.0
    %1941 = vmatpush2.msra.mxu0 0.0
    %1942 = vmatprep.subr.mxu0 0.0
    %1943 = vmatpush2.msra.mxu0 0.0
    %1944 = vmatprep.subr.mxu0 0.0
    %1945 = vmatpush2.msra.mxu0 0.0
    %1946 = vmatprep.subr.mxu0 0.0
    %1947 = vmatpush2.msra.mxu0 0.0
    %1948 = vmatprep.subr.mxu0 0.0
    %1949 = vmatpush2.msra.mxu0 0.0
    %1950 = vmatprep.subr.mxu0 0.0
    %1951 = vmatpush2.msra.mxu0 0.0
    %1952 = vmatprep.subr.mxu0 0.0
    %1953 = vmatpush2.msra.mxu0 0.0
    %1954 = vmatprep.subr.mxu0 0.0
    %1955 = vmatpush2.msra.mxu0 0.0
    %1956 = vmatprep.subr.mxu0 0.0
    %1957 = vmatpush2.msra.mxu0 0.0
    %1958 = vmatprep.mubr.f32.mxu0 0.0
    %1959 = vmatmul.mubr.f32.gmra.mxu0 %v1889
    %v1960 = vpop.f32.mrf.mxu0
    %v1961 = vadd.f32 0.0, %v1960
    %v1962 = vpop.f32.mrf.mxu0
    %v1963 = vadd.f32 0.0, %v1962
    %1964 = vmatprep.mubr.f32.mxu0 0.0
    %1965 = vmatmul.mubr.f32.gmra.mxu0 %v1892
    %v1966 = vpop.f32.mrf.mxu0
    %v1967 = vadd.f32 0.0, %v1966
    %v1968 = vpop.f32.mrf.mxu0
    %v1969 = vadd.f32 0.0, %v1968
    %1970 = vdwg.mxu0
    %v1971 = vadd.f32 %v1865, %v1961
    %v1972 = vadd.f32 %v1866, %v1963
    %v1973 = vadd.f32 %v1867, %v1967
    %v1974 = vadd.f32 %v1868, %v1969
    %v1975 = vmax.f32 %v1971, 0.0
    %v1976 = vmax.f32 %v1972, 0.0
    %v1977 = vmax.f32 %v1973, 0.0
    %v1978 = vmax.f32 %v1974, 0.0
    %v1979 = vld [vmem:[%s4] sm:$0xff]
    %1980 = vset.pattern.permute.xlu0 2
    %1981 = vperm.xlu0 %1980, %v26
    %v1982 = vpop.permute.xlu0 %1981
    %v1985 = vsel %vm1055, %v1979, 0
    %1987 = vmatprep.subr.mxu0 0.0
    %1988 = vmatpush1.msra.mxu0 0.0
    %1989 = vmatprep.subr.mxu0 0.0
    %1990 = vmatpush1.msra.mxu0 0.0
    %1991 = vmatprep.subr.mxu0 0.0
    %1992 = vmatpush1.msra.mxu0 0.0
    %1993 = vmatprep.subr.mxu0 0.0
    %1994 = vmatpush1.msra.mxu0 0.0
    %1995 = vmatprep.subr.mxu0 0.0
    %1996 = vmatpush1.msra.mxu0 0.0
    %1997 = vmatprep.subr.mxu0 0.0
    %1998 = vmatpush1.msra.mxu0 0.0
    %1999 = vmatprep.subr.mxu0 0.0
    %2000 = vmatpush1.msra.mxu0 0.0
    %2001 = vmatprep.subr.mxu0 0.0
    %2002 = vmatpush1.msra.mxu0 0.0
    %2003 = vmatprep.subr.mxu0 0.0
    %2004 = vmatpush1.msra.mxu0 0.0
    %2005 = vmatprep.subr.mxu0 0.0
    %2006 = vmatpush1.msra.mxu0 0.0
    %2007 = vmatprep.subr.mxu0 0.0
    %2008 = vmatpush1.msra.mxu0 0.0
    %2009 = vmatprep.subr.mxu0 0.0
    %2010 = vmatpush1.msra.mxu0 0.0
    %2011 = vmatprep.subr.mxu0 0.0
    %2012 = vmatpush1.msra.mxu0 0.0
    %2013 = vmatprep.subr.mxu0 0.0
    %2014 = vmatpush1.msra.mxu0 0.0
    %2015 = vmatprep.subr.mxu0 %v1978
    %2016 = vmatpush1.msra.mxu0 %v1977
    %2017 = vmatprep.subr.mxu0 %v1976
    %2018 = vmatpush1.msra.mxu0 %v1975
    %2019 = vmatprep.subr.mxu0 0.0
    %2020 = vmatpush2.msra.mxu0 0.0
    %2021 = vmatprep.subr.mxu0 0.0
    %2022 = vmatpush2.msra.mxu0 0.0
    %2023 = vmatprep.subr.mxu0 0.0
    %2024 = vmatpush2.msra.mxu0 0.0
    %2025 = vmatprep.subr.mxu0 0.0
    %2026 = vmatpush2.msra.mxu0 0.0
    %2027 = vmatprep.subr.mxu0 0.0
    %2028 = vmatpush2.msra.mxu0 0.0
    %2029 = vmatprep.subr.mxu0 0.0
    %2030 = vmatpush2.msra.mxu0 0.0
    %2031 = vmatprep.subr.mxu0 0.0
    %2032 = vmatpush2.msra.mxu0 0.0
    %2033 = vmatprep.subr.mxu0 0.0
    %2034 = vmatpush2.msra.mxu0 0.0
    %2035 = vmatprep.subr.mxu0 0.0
    %2036 = vmatpush2.msra.mxu0 0.0
    %2037 = vmatprep.subr.mxu0 0.0
    %2038 = vmatpush2.msra.mxu0 0.0
    %2039 = vmatprep.subr.mxu0 0.0
    %2040 = vmatpush2.msra.mxu0 0.0
    %2041 = vmatprep.subr.mxu0 0.0
    %2042 = vmatpush2.msra.mxu0 0.0
    %2043 = vmatprep.subr.mxu0 0.0
    %2044 = vmatpush2.msra.mxu0 0.0
    %2045 = vmatprep.subr.mxu0 0.0
    %2046 = vmatpush2.msra.mxu0 0.0
    %2047 = vmatprep.subr.mxu0 0.0
    %2048 = vmatpush2.msra.mxu0 0.0
    %2049 = vmatprep.subr.mxu0 0.0
    %2050 = vmatpush2.msra.mxu0 0.0
    %2051 = vmatprep.mubr.f32.mxu0 0.0
    %2052 = vmatmul.mubr.f32.gmra.mxu0 %v1985
    %v2053 = vpop.f32.mrf.mxu0
    %v2054 = vadd.f32 %v1982, %v2053
    %v2055 = vpop.f32.mrf.mxu0
    %v2056 = vadd.f32 %v1982, %v2055
    %2057 = vdwg.mxu0
    %v2058 = vxor.u32 %v2054, 2147483648
    %v2059 = vxor.u32 %v2056, 2147483648
    %v2060 = vmul.f32 %v2058, 1.442695
    %v2061 = vpow.pop %v2060
    %v2062 = vmul.f32 %v2059, 1.442695
    %v2063 = vpow.pop %v2062
    %v2064 = vadd.f32 %v2061, 1.0
    %v2065 = vadd.f32 %v2063, 1.0
    %v2066 = vrcp.pop %v2064
    %v2067 = vmul.f32 1.0, %v2066
    %v2068 = vrcp.pop %v2065
    %v2069 = vmul.f32 1.0, %v2068
    %v2070 = vmul.f32 %v24, %v2067
    %v2071 = vmul.f32 %v25, %v2069
    %2072 = vst [vmem:[#allocation2] sm:$0xff] %v2070
    %2073 = vst [vmem:[#allocation2 + $0x8] sm:$0xff] %v2071
    // Predicated region
    $region26: #{tpu_custom_call.1} parent=1 // pred_check
      _
    $region27: #{tpu_custom_call.1} parent=1 // pred_check_branch
      %2075 = sbr.rel (0) target = $region29
    $region28: #{tpu_custom_call.1} parent=1 // pred_region
      %s2077 = ssub.s32 256, 256
      %2078 = vsyncadd [#allocation3], %s2077
      %s2080 = sshll.u32 [#allocation2], 4
      %s2081 = int_to_ptr.vmem [resolvable:$true] %s2080
      %2083 = dma.vmem_to_hbm [thread:$0]  %s2081, 256, %s6, [#allocation3]
    $region29: #{tpu_custom_call.1} parent=1 // pred_fallthru
      _
    // Predicated region
    $region30: #{tpu_custom_call.1} parent=1 // pred_check
      _
    $region31: #{tpu_custom_call.1} parent=1 // pred_check_branch
      %2085 = sbr.rel (0) target = $region33
    $region32: #{tpu_custom_call.1} parent=1 // pred_region
      %2086 = dma.done [#allocation3], 256
    $region33: #{tpu_custom_call.1} parent=1 // pred_fallthru
      _
    %2087 = vsyncpa [#allocation3], 1

</llo_original>
